<compile_context>
chip_gen: v6e
topology: v6e:2x2x1
jax: 0.10.0
libtpu: 0.0.40
codegen_flags: <defaults>
</compile_context>

<pallas_src>
import math
import jax
import jax.numpy as jnp
from jax import lax
from jax.experimental import pallas as pl
from jax.experimental.pallas import tpu as pltpu

# ---- small synthetic XLM-Roberta-ish config (lane-dense: multiples of 128) ----
VOCAB = 128
HIDDEN = 128
INTER = 256
LAYERS = 2
SEQ = 8
BATCH = 2
PAD_ID, CLS_ID, EOS_ID, UNK_ID = 1, 0, 2, 3   # XLM-Roberta tokenizer special ids
LN_EPS = 1e-5
NORM_EPS2 = 1e-24                             # (F.normalize eps = 1e-12) ** 2


def _layernorm(x, g, b, eps=LN_EPS):
    mu = jnp.mean(x, axis=-1, keepdims=True)
    var = jnp.mean(jnp.square(x - mu), axis=-1, keepdims=True)
    return (x - mu) * lax.rsqrt(var + eps) * g + b


# ---------------- fused Pallas kernel (no grid: everything VMEM resident) ----------------

def fused_forward_kernel(
        emb_ref,        # (B*S, H)   embeddings (word+pos+type), pre-LayerNorm
        bias_ref,       # (B*S, B*S) block-diagonal + key-padding additive bias
        mask_ref,       # (B*S, 1)   attention mask as float column
        onehot_ref,     # (B*S, V)   one-hot(input_ids), unused-token columns pre-zeroed
        wqkv_ref,       # (L, H, 3H) fused q|k|v weights
        bqkv_ref,       # (L, 1, 3H) fused q|k|v biases
        wo_ref,         # (L, H, H)
        wi_ref,         # (L, H, I)
        bi_ref,         # (L, 1, I)
        wf_ref,         # (L, I, H)
        lvec_ref,       # (L, 6, H)  rows: bo, ln1_g, ln1_b, bf, ln2_g, ln2_b
        wc_ref,         # (H, H)     colbert_linear weight
        hvec_ref,       # (4, H)     rows: emb_ln_g, emb_ln_b, colbert bias, sparse weight row
        bsp_ref,        # (1, 1)     sparse_linear bias
        colbert_ref,    # (B*S, H)   out: normalized colbert vectors (full sequence)
        heads_ref):     # (B, H+V)   out: [dense | sparse] per batch element
    n_layers = wqkv_ref.shape[0]
    bs, hid = emb_ref.shape
    b_count = heads_ref.shape[0]
    seq = bs // b_count

    # --- embedding LayerNorm ---
    h = _layernorm(emb_ref[...], hvec_ref[0:1, :], hvec_ref[1:2, :])

    scale = 1.0 / math.sqrt(float(hid))
    bias = bias_ref[...]

    # --- encoder layers: statically unrolled, all weights already in VMEM ---
    for l in range(n_layers):
        qkv = jnp.dot(h, wqkv_ref[l], preferred_element_type=jnp.float32) + bqkv_ref[l]
        q = qkv[:, 0:hid]
        k = qkv[:, hid:2 * hid]
        v = qkv[:, 2 * hid:3 * hid]
        # q @ k^T without materializing a transpose (keeps the XLU free for reductions)
        scores = lax.dot_general(q, k, (((1,), (1,)), ((), ())),
                                 preferred_element_type=jnp.float32)
        scores = scores * scale + bias
        m = jnp.max(scores, axis=-1, keepdims=True)
        e = jnp.exp(scores - m)
        p = e * pl.reciprocal(jnp.sum(e, axis=-1, keepdims=True), approx=True)
        ctx = jnp.dot(p, v, preferred_element_type=jnp.float32)

        lv = lvec_ref[l]                                            # (6, H)
        attn = jnp.dot(ctx, wo_ref[l], preferred_element_type=jnp.float32) + lv[0:1, :]
        h1 = _layernorm(h + attn, lv[1:2, :], lv[2:3, :])
        ff = jnp.dot(h1, wi_ref[l], preferred_element_type=jnp.float32) + bi_ref[l]
        # TODO(synk): HF XLM-Roberta "gelu" is erf-based; tanh approximation used here.
        ff = jax.nn.gelu(ff, approximate=True)
        ff = jnp.dot(ff, wf_ref[l], preferred_element_type=jnp.float32) + lv[3:4, :]
        h = _layernorm(h1 + ff, lv[4:5, :], lv[5:6, :])

    # --- colbert head: full flattened sequence; wrapper drops token 0 per batch.
    # Mask applied before normalization (matches F.normalize: masked rows -> 0 vectors).
    cv = jnp.dot(h, wc_ref[...], preferred_element_type=jnp.float32) + hvec_ref[2:3, :]
    cv = cv * mask_ref[...]
    cn = jnp.sum(cv * cv, axis=-1, keepdims=True)
    colbert_ref[...] = cv * lax.rsqrt(jnp.maximum(cn, NORM_EPS2))

    # --- sparse token weights (relu of sparse_linear) ---
    tw = jnp.sum(h * hvec_ref[3:4, :], axis=-1, keepdims=True) + bsp_ref[...]
    tw = jnp.maximum(tw, 0.0)                                       # (B*S, 1)
    scat = onehot_ref[...] * tw                                     # (B*S, V)

    # --- per-batch dense (cls pooling, normalized) + sparse (max over sequence),
    # merged into one lane-dense (B, H+V) slab written with a single store.
    rows = []
    for b in range(b_count):                                        # static, tiny
        cls_vec = h[b * seq:b * seq + 1, :]                         # (1, H)
        dn = jnp.sum(cls_vec * cls_vec, axis=-1, keepdims=True)
        dense = cls_vec * lax.rsqrt(jnp.maximum(dn, NORM_EPS2))
        sparse = jnp.max(scat[b * seq:(b + 1) * seq, :], axis=0, keepdims=True)
        rows.append(jnp.concatenate([dense, sparse], axis=-1))      # (1, H+V)
    heads_ref[...] = jnp.concatenate(rows, axis=0)                  # (B, H+V)


# ---------------- params / wrapper ----------------

def init_params(key):
    ks = jax.random.split(key, 8)

    def w(k, shape):
        return jax.random.normal(k, shape, jnp.float32) * 0.02

    params = {
        'word_emb': w(ks[0], (VOCAB, HIDDEN)),
        'pos_emb':  w(ks[1], (SEQ + PAD_ID + 2, HIDDEN)),
        'type_emb': w(ks[2], (1, HIDDEN)),
        'emb_ln_g': jnp.ones((1, HIDDEN), jnp.float32),
        'emb_ln_b': jnp.zeros((1, HIDDEN), jnp.float32),
        'layers': [],
        # BGE-M3 pooler heads (torch nn.Linear, stored as (in, out) / row layouts)
        'wc':  w(ks[3], (HIDDEN, HIDDEN)),          # colbert_linear (colbert_dim=-1)
        'bc':  jnp.zeros((1, HIDDEN), jnp.float32),
        'wsp': w(ks[4], (1, HIDDEN)),               # sparse_linear weight as a row
        'bsp': jnp.zeros((1, 1), jnp.float32),
    }
    for lk in jax.random.split(ks[5], LAYERS):
        wk = jax.random.split(lk, 6)
        params['layers'].append({
            'wq': w(wk[0], (HIDDEN, HIDDEN)), 'bq': jnp.zeros((1, HIDDEN), jnp.float32),
            'wk': w(wk[1], (HIDDEN, HIDDEN)), 'bk': jnp.zeros((1, HIDDEN), jnp.float32),
            'wv': w(wk[2], (HIDDEN, HIDDEN)), 'bv': jnp.zeros((1, HIDDEN), jnp.float32),
            'wo': w(wk[3], (HIDDEN, HIDDEN)), 'bo': jnp.zeros((1, HIDDEN), jnp.float32),
            'g1': jnp.ones((1, HIDDEN), jnp.float32), 'b1': jnp.zeros((1, HIDDEN), jnp.float32),
            'wi': w(wk[4], (HIDDEN, INTER)),  'bi': jnp.zeros((1, INTER), jnp.float32),
            'wf': w(wk[5], (INTER, HIDDEN)),  'bf': jnp.zeros((1, HIDDEN), jnp.float32),
            'g2': jnp.ones((1, HIDDEN), jnp.float32), 'b2': jnp.zeros((1, HIDDEN), jnp.float32),
        })
    return params


def bge_m3_forward(params, input_ids, attention_mask):
    """Equivalent of BGEM3Model.forward with return_dense/sparse/colbert all True,
    return_sparse_embedding=True, normlized=True, sentence_pooling_method='cls'."""
    B, S = input_ids.shape
    BS = B * S
    mask_f = attention_mask.astype(jnp.float32)

    # --- embedding gathers stay in XLA glue; everything else is one Pallas call ---
    pos_ids = (jnp.cumsum(attention_mask, axis=1) * attention_mask) + PAD_ID
    emb = (params['word_emb'][input_ids]
           + params['pos_emb'][pos_ids]
           + params['type_emb'][0][None, None, :]).reshape(BS, HIDDEN)

    # block-diagonal additive attention bias over the flattened (B*S) tokens:
    # query i may only attend keys of its own batch element that are not padding.
    key_bias = ((mask_f - 1.0) * 1e9).reshape(BS)               # 0 valid / -1e9 pad
    bidx = jnp.repeat(jnp.arange(B), S)
    same_batch = bidx[:, None] == bidx[None, :]
    attn_bias = jnp.where(same_batch, key_bias[None, :], -1e9).astype(jnp.float32)

    mask_col = mask_f.reshape(BS, 1)

    # one-hot scatter matrix with unused-token columns pre-zeroed (equivalent to the
    # torch post-max zeroing since relu weights are >= 0; pad tokens map to PAD_ID
    # which is zeroed, so max over the full sequence is safe).
    unused = jnp.ones((VOCAB,), jnp.float32)
    unused = unused.at[jnp.array([CLS_ID, EOS_ID, PAD_ID, UNK_ID])].set(0.0)
    onehot = jax.nn.one_hot(input_ids.reshape(BS), VOCAB, dtype=jnp.float32) * unused[None, :]

    # consolidated, stacked per-layer weights (all VMEM resident inside the kernel)
    L = params['layers']
    wqkv = jnp.stack([jnp.concatenate([lp['wq'], lp['wk'], lp['wv']], axis=1) for lp in L])
    bqkv = jnp.stack([jnp.concatenate([lp['bq'], lp['bk'], lp['bv']], axis=1) for lp in L])
    wo = jnp.stack([lp['wo'] for lp in L])
    wi = jnp.stack([lp['wi'] for lp in L])
    bi = jnp.stack([lp['bi'] for lp in L])
    wf = jnp.stack([lp['wf'] for lp in L])
    lvecs = jnp.stack([jnp.concatenate([lp['bo'], lp['g1'], lp['b1'],
                                        lp['bf'], lp['g2'], lp['b2']], axis=0) for lp in L])
    hvecs = jnp.concatenate([params['emb_ln_g'], params['emb_ln_b'],
                             params['bc'], params['wsp']], axis=0)   # (4, H)

    colbert_full, heads = pl.pallas_call(
        fused_forward_kernel,
        out_shape=(jax.ShapeDtypeStruct((BS, HIDDEN), jnp.float32),
                   jax.ShapeDtypeStruct((B, HIDDEN + VOCAB), jnp.float32)),
        compiler_params=pltpu.CompilerParams(
            vmem_limit_bytes=16 * 1024 * 1024),
    )(emb, attn_bias, mask_col, onehot,
      wqkv, bqkv, wo, wi, bi, wf, lvecs,
      params['wc'], hvecs, params['bsp'])

    colbert = colbert_full.reshape(B, S, HIDDEN)[:, 1:, :]
    return {'dense_vecs': heads[:, :HIDDEN],
            'sparse_vecs': heads[:, HIDDEN:],
            'colbert_vecs': colbert}


if __name__ == "__main__":
    key = jax.random.PRNGKey(0)
    pkey, dkey = jax.random.split(key)
    params = init_params(pkey)

    # deterministic toy token ids (vocab ids >= 4 are "normal" tokens)
    input_ids = jax.random.randint(dkey, (BATCH, SEQ), 4, VOCAB, dtype=jnp.int32)
    input_ids = input_ids.at[:, 0].set(CLS_ID)
    input_ids = input_ids.at[:, -1].set(EOS_ID)
    input_ids = input_ids.at[1, -3:].set(jnp.array([EOS_ID, PAD_ID, PAD_ID]))
    attention_mask = (input_ids != PAD_ID).astype(jnp.int32)

    fwd = jax.jit(lambda ids, m: bge_m3_forward(params, ids, m))
    out = fwd(input_ids, attention_mask)
    jax.tree_util.tree_map(jax.block_until_ready, out)

    assert out['dense_vecs'].shape == (BATCH, HIDDEN)
    assert out['sparse_vecs'].shape == (BATCH, VOCAB)
    assert out['colbert_vecs'].shape == (BATCH, SEQ - 1, HIDDEN)
    print("KERNEL_OK")
</pallas_src>

<mosaic_0001>
module attributes {stable_mosaic.version = 11 : i64} {
  func.func @fused_forward_kernel(%arg0: memref<16x128xf32, #tpu.memory_space<vmem>>, %arg1: memref<16x16xf32, #tpu.memory_space<vmem>>, %arg2: memref<16x1xf32, #tpu.memory_space<vmem>>, %arg3: memref<16x128xf32, #tpu.memory_space<vmem>>, %arg4: memref<2x128x384xf32, #tpu.memory_space<vmem>>, %arg5: memref<2x1x384xf32, #tpu.memory_space<vmem>>, %arg6: memref<2x128x128xf32, #tpu.memory_space<vmem>>, %arg7: memref<2x128x256xf32, #tpu.memory_space<vmem>>, %arg8: memref<2x1x256xf32, #tpu.memory_space<vmem>>, %arg9: memref<2x256x128xf32, #tpu.memory_space<vmem>>, %arg10: memref<2x6x128xf32, #tpu.memory_space<vmem>>, %arg11: memref<128x128xf32, #tpu.memory_space<vmem>>, %arg12: memref<4x128xf32, #tpu.memory_space<vmem>>, %arg13: memref<1x1xf32, #tpu.memory_space<vmem>>, %arg14: memref<16x128xf32, #tpu.memory_space<vmem>>, %arg15: memref<2x256xf32, #tpu.memory_space<vmem>>) attributes {dimension_semantics = [], scalar_prefetch = 0 : i64, scratch_operands = 0 : i64, tpu.core_type = #tpu.core_type<tc>} {
    %c0 = arith.constant 0 : index
    %c0_0 = arith.constant 0 : index
    %0 = vector.load %arg0[%c0, %c0_0] : memref<16x128xf32, #tpu.memory_space<vmem>>, vector<16x128xf32>
    %c0_1 = arith.constant 0 : index
    %c0_2 = arith.constant 0 : index
    %1 = vector.load %arg12[%c0_1, %c0_2] : memref<4x128xf32, #tpu.memory_space<vmem>>, vector<1x128xf32>
    %c1 = arith.constant 1 : index
    %c0_3 = arith.constant 0 : index
    %2 = vector.load %arg12[%c1, %c0_3] : memref<4x128xf32, #tpu.memory_space<vmem>>, vector<1x128xf32>
    %cst = arith.constant dense<0.000000e+00> : vector<16xf32>
    %3 = vector.multi_reduction <add>, %0, %cst [1] : vector<16x128xf32> to vector<16xf32>
    %4 = vector.shape_cast %3 : vector<16xf32> to vector<16x1xf32>
    %cst_4 = arith.constant 1.280000e+02 : f32
    %5 = vector.broadcast %cst_4 : f32 to vector<16x1xf32>
    %6 = arith.divf %4, %5 : vector<16x1xf32>
    %7 = vector.broadcast %6 : vector<16x1xf32> to vector<16x128xf32>
    %8 = arith.subf %0, %7 : vector<16x128xf32>
    %9 = arith.mulf %8, %8 : vector<16x128xf32>
    %cst_5 = arith.constant dense<0.000000e+00> : vector<16xf32>
    %10 = vector.multi_reduction <add>, %9, %cst_5 [1] : vector<16x128xf32> to vector<16xf32>
    %11 = vector.shape_cast %10 : vector<16xf32> to vector<16x1xf32>
    %cst_6 = arith.constant 1.280000e+02 : f32
    %12 = vector.broadcast %cst_6 : f32 to vector<16x1xf32>
    %13 = arith.divf %11, %12 : vector<16x1xf32>
    %14 = vector.broadcast %6 : vector<16x1xf32> to vector<16x128xf32>
    %15 = arith.subf %0, %14 : vector<16x128xf32>
    %cst_7 = arith.constant 9.99999974E-6 : f32
    %16 = vector.broadcast %cst_7 : f32 to vector<16x1xf32>
    %17 = arith.addf %13, %16 : vector<16x1xf32>
    %18 = math.rsqrt %17 : vector<16x1xf32>
    %19 = vector.broadcast %18 : vector<16x1xf32> to vector<16x128xf32>
    %20 = arith.mulf %15, %19 : vector<16x128xf32>
    %21 = vector.broadcast %1 : vector<1x128xf32> to vector<16x128xf32>
    %22 = arith.mulf %20, %21 : vector<16x128xf32>
    %23 = vector.broadcast %2 : vector<1x128xf32> to vector<16x128xf32>
    %24 = arith.addf %22, %23 : vector<16x128xf32>
    %c0_8 = arith.constant 0 : index
    %c0_9 = arith.constant 0 : index
    %25 = vector.load %arg1[%c0_8, %c0_9] : memref<16x16xf32, #tpu.memory_space<vmem>>, vector<16x16xf32>
    %c0_10 = arith.constant 0 : index
    %c0_11 = arith.constant 0 : index
    %c0_12 = arith.constant 0 : index
    %26 = vector.load %arg4[%c0_10, %c0_11, %c0_12] : memref<2x128x384xf32, #tpu.memory_space<vmem>>, vector<1x128x384xf32>
    %27 = vector.shape_cast %26 : vector<1x128x384xf32> to vector<128x384xf32>
    %cst_13 = arith.constant dense<0.000000e+00> : vector<16x384xf32>
    %28 = tpu.matmul %24, %27, %cst_13 {dimension_numbers = #tpu.dot_dimension_numbers<[1], [0], [0], [1], [0, 0, 1, 1], [], []>} : vector<16x128xf32>, vector<128x384xf32>, vector<16x384xf32> -> vector<16x384xf32>
    %c0_14 = arith.constant 0 : index
    %c0_15 = arith.constant 0 : index
    %c0_16 = arith.constant 0 : index
    %29 = vector.load %arg5[%c0_14, %c0_15, %c0_16] : memref<2x1x384xf32, #tpu.memory_space<vmem>>, vector<1x1x384xf32>
    %30 = vector.shape_cast %29 : vector<1x1x384xf32> to vector<1x384xf32>
    %31 = vector.broadcast %30 : vector<1x384xf32> to vector<16x384xf32>
    %32 = arith.addf %28, %31 : vector<16x384xf32>
    %33 = vector.extract_strided_slice %32 {offsets = [0, 0], sizes = [16, 128], strides = [1, 1]} : vector<16x384xf32> to vector<16x128xf32>
    %34 = vector.extract_strided_slice %32 {offsets = [0, 128], sizes = [16, 128], strides = [1, 1]} : vector<16x384xf32> to vector<16x128xf32>
    %35 = vector.extract_strided_slice %32 {offsets = [0, 256], sizes = [16, 128], strides = [1, 1]} : vector<16x384xf32> to vector<16x128xf32>
    %cst_17 = arith.constant dense<0.000000e+00> : vector<16x16xf32>
    %36 = tpu.matmul %33, %34, %cst_17 {dimension_numbers = #tpu.dot_dimension_numbers<[1], [1], [0], [0], [0, 0, 1, 0], [], []>} : vector<16x128xf32>, vector<16x128xf32>, vector<16x16xf32> -> vector<16x16xf32>
    %cst_18 = arith.constant 0.0883883461 : f32
    %37 = vector.broadcast %cst_18 : f32 to vector<16x16xf32>
    %38 = arith.mulf %36, %37 : vector<16x16xf32>
    %39 = arith.addf %38, %25 : vector<16x16xf32>
    %cst_19 = arith.constant dense<0xFF800000> : vector<16xf32>
    %40 = vector.multi_reduction <maximumf>, %39, %cst_19 [1] : vector<16x16xf32> to vector<16xf32>
    %41 = vector.shape_cast %40 : vector<16xf32> to vector<16x1xf32>
    %42 = vector.broadcast %41 : vector<16x1xf32> to vector<16x16xf32>
    %43 = arith.subf %39, %42 : vector<16x16xf32>
    %44 = math.exp %43 : vector<16x16xf32>
    %cst_20 = arith.constant dense<0.000000e+00> : vector<16xf32>
    %45 = vector.multi_reduction <add>, %44, %cst_20 [1] : vector<16x16xf32> to vector<16xf32>
    %46 = vector.shape_cast %45 : vector<16xf32> to vector<16x1xf32>
    %47 = tpu.reciprocal %46 {approx = true} : vector<16x1xf32> -> vector<16x1xf32>
    %48 = vector.broadcast %47 : vector<16x1xf32> to vector<16x16xf32>
    %49 = arith.mulf %44, %48 : vector<16x16xf32>
    %cst_21 = arith.constant dense<0.000000e+00> : vector<16x128xf32>
    %50 = tpu.matmul %49, %35, %cst_21 {dimension_numbers = #tpu.dot_dimension_numbers<[1], [0], [0], [1], [0, 0, 1, 1], [], []>} : vector<16x16xf32>, vector<16x128xf32>, vector<16x128xf32> -> vector<16x128xf32>
    %c0_22 = arith.constant 0 : index
    %c0_23 = arith.constant 0 : index
    %c0_24 = arith.constant 0 : index
    %51 = vector.load %arg10[%c0_22, %c0_23, %c0_24] : memref<2x6x128xf32, #tpu.memory_space<vmem>>, vector<1x6x128xf32>
    %52 = vector.shape_cast %51 : vector<1x6x128xf32> to vector<6x128xf32>
    %c0_25 = arith.constant 0 : index
    %c0_26 = arith.constant 0 : index
    %c0_27 = arith.constant 0 : index
    %53 = vector.load %arg6[%c0_25, %c0_26, %c0_27] : memref<2x128x128xf32, #tpu.memory_space<vmem>>, vector<1x128x128xf32>
    %54 = vector.shape_cast %53 : vector<1x128x128xf32> to vector<128x128xf32>
    %cst_28 = arith.constant dense<0.000000e+00> : vector<16x128xf32>
    %55 = tpu.matmul %50, %54, %cst_28 {dimension_numbers = #tpu.dot_dimension_numbers<[1], [0], [0], [1], [0, 0, 1, 1], [], []>} : vector<16x128xf32>, vector<128x128xf32>, vector<16x128xf32> -> vector<16x128xf32>
    %56 = vector.extract_strided_slice %52 {offsets = [0, 0], sizes = [1, 128], strides = [1, 1]} : vector<6x128xf32> to vector<1x128xf32>
    %57 = vector.broadcast %56 : vector<1x128xf32> to vector<16x128xf32>
    %58 = arith.addf %55, %57 : vector<16x128xf32>
    %59 = arith.addf %24, %58 : vector<16x128xf32>
    %60 = vector.extract_strided_slice %52 {offsets = [1, 0], sizes = [1, 128], strides = [1, 1]} : vector<6x128xf32> to vector<1x128xf32>
    %61 = vector.extract_strided_slice %52 {offsets = [2, 0], sizes = [1, 128], strides = [1, 1]} : vector<6x128xf32> to vector<1x128xf32>
    %cst_29 = arith.constant dense<0.000000e+00> : vector<16xf32>
    %62 = vector.multi_reduction <add>, %59, %cst_29 [1] : vector<16x128xf32> to vector<16xf32>
    %63 = vector.shape_cast %62 : vector<16xf32> to vector<16x1xf32>
    %cst_30 = arith.constant 1.280000e+02 : f32
    %64 = vector.broadcast %cst_30 : f32 to vector<16x1xf32>
    %65 = arith.divf %63, %64 : vector<16x1xf32>
    %66 = vector.broadcast %65 : vector<16x1xf32> to vector<16x128xf32>
    %67 = arith.subf %59, %66 : vector<16x128xf32>
    %68 = arith.mulf %67, %67 : vector<16x128xf32>
    %cst_31 = arith.constant dense<0.000000e+00> : vector<16xf32>
    %69 = vector.multi_reduction <add>, %68, %cst_31 [1] : vector<16x128xf32> to vector<16xf32>
    %70 = vector.shape_cast %69 : vector<16xf32> to vector<16x1xf32>
    %cst_32 = arith.constant 1.280000e+02 : f32
    %71 = vector.broadcast %cst_32 : f32 to vector<16x1xf32>
    %72 = arith.divf %70, %71 : vector<16x1xf32>
    %73 = vector.broadcast %65 : vector<16x1xf32> to vector<16x128xf32>
    %74 = arith.subf %59, %73 : vector<16x128xf32>
    %cst_33 = arith.constant 9.99999974E-6 : f32
    %75 = vector.broadcast %cst_33 : f32 to vector<16x1xf32>
    %76 = arith.addf %72, %75 : vector<16x1xf32>
    %77 = math.rsqrt %76 : vector<16x1xf32>
    %78 = vector.broadcast %77 : vector<16x1xf32> to vector<16x128xf32>
    %79 = arith.mulf %74, %78 : vector<16x128xf32>
    %80 = vector.broadcast %60 : vector<1x128xf32> to vector<16x128xf32>
    %81 = arith.mulf %79, %80 : vector<16x128xf32>
    %82 = vector.broadcast %61 : vector<1x128xf32> to vector<16x128xf32>
    %83 = arith.addf %81, %82 : vector<16x128xf32>
    %c0_34 = arith.constant 0 : index
    %c0_35 = arith.constant 0 : index
    %c0_36 = arith.constant 0 : index
    %84 = vector.load %arg7[%c0_34, %c0_35, %c0_36] : memref<2x128x256xf32, #tpu.memory_space<vmem>>, vector<1x128x256xf32>
    %85 = vector.shape_cast %84 : vector<1x128x256xf32> to vector<128x256xf32>
    %cst_37 = arith.constant dense<0.000000e+00> : vector<16x256xf32>
    %86 = tpu.matmul %83, %85, %cst_37 {dimension_numbers = #tpu.dot_dimension_numbers<[1], [0], [0], [1], [0, 0, 1, 1], [], []>} : vector<16x128xf32>, vector<128x256xf32>, vector<16x256xf32> -> vector<16x256xf32>
    %c0_38 = arith.constant 0 : index
    %c0_39 = arith.constant 0 : index
    %c0_40 = arith.constant 0 : index
    %87 = vector.load %arg8[%c0_38, %c0_39, %c0_40] : memref<2x1x256xf32, #tpu.memory_space<vmem>>, vector<1x1x256xf32>
    %88 = vector.shape_cast %87 : vector<1x1x256xf32> to vector<1x256xf32>
    %89 = vector.broadcast %88 : vector<1x256xf32> to vector<16x256xf32>
    %90 = arith.addf %86, %89 : vector<16x256xf32>
    %91 = arith.mulf %90, %90 : vector<16x256xf32>
    %92 = arith.mulf %90, %91 : vector<16x256xf32>
    %cst_41 = arith.constant 4.471500e-02 : f32
    %93 = vector.broadcast %cst_41 : f32 to vector<16x256xf32>
    %94 = arith.mulf %93, %92 : vector<16x256xf32>
    %95 = arith.addf %90, %94 : vector<16x256xf32>
    %cst_42 = arith.constant 0.797884583 : f32
    %96 = vector.broadcast %cst_42 : f32 to vector<16x256xf32>
    %97 = arith.mulf %96, %95 : vector<16x256xf32>
    %98 = math.tanh %97 : vector<16x256xf32>
    %cst_43 = arith.constant 1.000000e+00 : f32
    %99 = vector.broadcast %cst_43 : f32 to vector<16x256xf32>
    %100 = arith.addf %99, %98 : vector<16x256xf32>
    %cst_44 = arith.constant 5.000000e-01 : f32
    %101 = vector.broadcast %cst_44 : f32 to vector<16x256xf32>
    %102 = arith.mulf %101, %100 : vector<16x256xf32>
    %103 = arith.mulf %90, %102 : vector<16x256xf32>
    %c0_45 = arith.constant 0 : index
    %c0_46 = arith.constant 0 : index
    %c0_47 = arith.constant 0 : index
    %104 = vector.load %arg9[%c0_45, %c0_46, %c0_47] : memref<2x256x128xf32, #tpu.memory_space<vmem>>, vector<1x256x128xf32>
    %105 = vector.shape_cast %104 : vector<1x256x128xf32> to vector<256x128xf32>
    %cst_48 = arith.constant dense<0.000000e+00> : vector<16x128xf32>
    %106 = tpu.matmul %103, %105, %cst_48 {dimension_numbers = #tpu.dot_dimension_numbers<[1], [0], [0], [1], [0, 0, 1, 1], [], []>} : vector<16x256xf32>, vector<256x128xf32>, vector<16x128xf32> -> vector<16x128xf32>
    %107 = vector.extract_strided_slice %52 {offsets = [3, 0], sizes = [1, 128], strides = [1, 1]} : vector<6x128xf32> to vector<1x128xf32>
    %108 = vector.broadcast %107 : vector<1x128xf32> to vector<16x128xf32>
    %109 = arith.addf %106, %108 : vector<16x128xf32>
    %110 = arith.addf %83, %109 : vector<16x128xf32>
    %111 = vector.extract_strided_slice %52 {offsets = [4, 0], sizes = [1, 128], strides = [1, 1]} : vector<6x128xf32> to vector<1x128xf32>
    %112 = vector.extract_strided_slice %52 {offsets = [5, 0], sizes = [1, 128], strides = [1, 1]} : vector<6x128xf32> to vector<1x128xf32>
    %cst_49 = arith.constant dense<0.000000e+00> : vector<16xf32>
    %113 = vector.multi_reduction <add>, %110, %cst_49 [1] : vector<16x128xf32> to vector<16xf32>
    %114 = vector.shape_cast %113 : vector<16xf32> to vector<16x1xf32>
    %cst_50 = arith.constant 1.280000e+02 : f32
    %115 = vector.broadcast %cst_50 : f32 to vector<16x1xf32>
    %116 = arith.divf %114, %115 : vector<16x1xf32>
    %117 = vector.broadcast %116 : vector<16x1xf32> to vector<16x128xf32>
    %118 = arith.subf %110, %117 : vector<16x128xf32>
    %119 = arith.mulf %118, %118 : vector<16x128xf32>
    %cst_51 = arith.constant dense<0.000000e+00> : vector<16xf32>
    %120 = vector.multi_reduction <add>, %119, %cst_51 [1] : vector<16x128xf32> to vector<16xf32>
    %121 = vector.shape_cast %120 : vector<16xf32> to vector<16x1xf32>
    %cst_52 = arith.constant 1.280000e+02 : f32
    %122 = vector.broadcast %cst_52 : f32 to vector<16x1xf32>
    %123 = arith.divf %121, %122 : vector<16x1xf32>
    %124 = vector.broadcast %116 : vector<16x1xf32> to vector<16x128xf32>
    %125 = arith.subf %110, %124 : vector<16x128xf32>
    %cst_53 = arith.constant 9.99999974E-6 : f32
    %126 = vector.broadcast %cst_53 : f32 to vector<16x1xf32>
    %127 = arith.addf %123, %126 : vector<16x1xf32>
    %128 = math.rsqrt %127 : vector<16x1xf32>
    %129 = vector.broadcast %128 : vector<16x1xf32> to vector<16x128xf32>
    %130 = arith.mulf %125, %129 : vector<16x128xf32>
    %131 = vector.broadcast %111 : vector<1x128xf32> to vector<16x128xf32>
    %132 = arith.mulf %130, %131 : vector<16x128xf32>
    %133 = vector.broadcast %112 : vector<1x128xf32> to vector<16x128xf32>
    %134 = arith.addf %132, %133 : vector<16x128xf32>
    %c1_54 = arith.constant 1 : index
    %c0_55 = arith.constant 0 : index
    %c0_56 = arith.constant 0 : index
    %135 = vector.load %arg4[%c1_54, %c0_55, %c0_56] : memref<2x128x384xf32, #tpu.memory_space<vmem>>, vector<1x128x384xf32>
    %136 = vector.shape_cast %135 : vector<1x128x384xf32> to vector<128x384xf32>
    %cst_57 = arith.constant dense<0.000000e+00> : vector<16x384xf32>
    %137 = tpu.matmul %134, %136, %cst_57 {dimension_numbers = #tpu.dot_dimension_numbers<[1], [0], [0], [1], [0, 0, 1, 1], [], []>} : vector<16x128xf32>, vector<128x384xf32>, vector<16x384xf32> -> vector<16x384xf32>
    %c1_58 = arith.constant 1 : index
    %c0_59 = arith.constant 0 : index
    %c0_60 = arith.constant 0 : index
    %138 = vector.load %arg5[%c1_58, %c0_59, %c0_60] : memref<2x1x384xf32, #tpu.memory_space<vmem>>, vector<1x1x384xf32>
    %139 = vector.shape_cast %138 : vector<1x1x384xf32> to vector<1x384xf32>
    %140 = vector.broadcast %139 : vector<1x384xf32> to vector<16x384xf32>
    %141 = arith.addf %137, %140 : vector<16x384xf32>
    %142 = vector.extract_strided_slice %141 {offsets = [0, 0], sizes = [16, 128], strides = [1, 1]} : vector<16x384xf32> to vector<16x128xf32>
    %143 = vector.extract_strided_slice %141 {offsets = [0, 128], sizes = [16, 128], strides = [1, 1]} : vector<16x384xf32> to vector<16x128xf32>
    %144 = vector.extract_strided_slice %141 {offsets = [0, 256], sizes = [16, 128], strides = [1, 1]} : vector<16x384xf32> to vector<16x128xf32>
    %cst_61 = arith.constant dense<0.000000e+00> : vector<16x16xf32>
    %145 = tpu.matmul %142, %143, %cst_61 {dimension_numbers = #tpu.dot_dimension_numbers<[1], [1], [0], [0], [0, 0, 1, 0], [], []>} : vector<16x128xf32>, vector<16x128xf32>, vector<16x16xf32> -> vector<16x16xf32>
    %cst_62 = arith.constant 0.0883883461 : f32
    %146 = vector.broadcast %cst_62 : f32 to vector<16x16xf32>
    %147 = arith.mulf %145, %146 : vector<16x16xf32>
    %148 = arith.addf %147, %25 : vector<16x16xf32>
    %cst_63 = arith.constant dense<0xFF800000> : vector<16xf32>
    %149 = vector.multi_reduction <maximumf>, %148, %cst_63 [1] : vector<16x16xf32> to vector<16xf32>
    %150 = vector.shape_cast %149 : vector<16xf32> to vector<16x1xf32>
    %151 = vector.broadcast %150 : vector<16x1xf32> to vector<16x16xf32>
    %152 = arith.subf %148, %151 : vector<16x16xf32>
    %153 = math.exp %152 : vector<16x16xf32>
    %cst_64 = arith.constant dense<0.000000e+00> : vector<16xf32>
    %154 = vector.multi_reduction <add>, %153, %cst_64 [1] : vector<16x16xf32> to vector<16xf32>
    %155 = vector.shape_cast %154 : vector<16xf32> to vector<16x1xf32>
    %156 = tpu.reciprocal %155 {approx = true} : vector<16x1xf32> -> vector<16x1xf32>
    %157 = vector.broadcast %156 : vector<16x1xf32> to vector<16x16xf32>
    %158 = arith.mulf %153, %157 : vector<16x16xf32>
    %cst_65 = arith.constant dense<0.000000e+00> : vector<16x128xf32>
    %159 = tpu.matmul %158, %144, %cst_65 {dimension_numbers = #tpu.dot_dimension_numbers<[1], [0], [0], [1], [0, 0, 1, 1], [], []>} : vector<16x16xf32>, vector<16x128xf32>, vector<16x128xf32> -> vector<16x128xf32>
    %c1_66 = arith.constant 1 : index
    %c0_67 = arith.constant 0 : index
    %c0_68 = arith.constant 0 : index
    %160 = vector.load %arg10[%c1_66, %c0_67, %c0_68] : memref<2x6x128xf32, #tpu.memory_space<vmem>>, vector<1x6x128xf32>
    %161 = vector.shape_cast %160 : vector<1x6x128xf32> to vector<6x128xf32>
    %c1_69 = arith.constant 1 : index
    %c0_70 = arith.constant 0 : index
    %c0_71 = arith.constant 0 : index
    %162 = vector.load %arg6[%c1_69, %c0_70, %c0_71] : memref<2x128x128xf32, #tpu.memory_space<vmem>>, vector<1x128x128xf32>
    %163 = vector.shape_cast %162 : vector<1x128x128xf32> to vector<128x128xf32>
    %cst_72 = arith.constant dense<0.000000e+00> : vector<16x128xf32>
    %164 = tpu.matmul %159, %163, %cst_72 {dimension_numbers = #tpu.dot_dimension_numbers<[1], [0], [0], [1], [0, 0, 1, 1], [], []>} : vector<16x128xf32>, vector<128x128xf32>, vector<16x128xf32> -> vector<16x128xf32>
    %165 = vector.extract_strided_slice %161 {offsets = [0, 0], sizes = [1, 128], strides = [1, 1]} : vector<6x128xf32> to vector<1x128xf32>
    %166 = vector.broadcast %165 : vector<1x128xf32> to vector<16x128xf32>
    %167 = arith.addf %164, %166 : vector<16x128xf32>
    %168 = arith.addf %134, %167 : vector<16x128xf32>
    %169 = vector.extract_strided_slice %161 {offsets = [1, 0], sizes = [1, 128], strides = [1, 1]} : vector<6x128xf32> to vector<1x128xf32>
    %170 = vector.extract_strided_slice %161 {offsets = [2, 0], sizes = [1, 128], strides = [1, 1]} : vector<6x128xf32> to vector<1x128xf32>
    %cst_73 = arith.constant dense<0.000000e+00> : vector<16xf32>
    %171 = vector.multi_reduction <add>, %168, %cst_73 [1] : vector<16x128xf32> to vector<16xf32>
    %172 = vector.shape_cast %171 : vector<16xf32> to vector<16x1xf32>
    %cst_74 = arith.constant 1.280000e+02 : f32
    %173 = vector.broadcast %cst_74 : f32 to vector<16x1xf32>
    %174 = arith.divf %172, %173 : vector<16x1xf32>
    %175 = vector.broadcast %174 : vector<16x1xf32> to vector<16x128xf32>
    %176 = arith.subf %168, %175 : vector<16x128xf32>
    %177 = arith.mulf %176, %176 : vector<16x128xf32>
    %cst_75 = arith.constant dense<0.000000e+00> : vector<16xf32>
    %178 = vector.multi_reduction <add>, %177, %cst_75 [1] : vector<16x128xf32> to vector<16xf32>
    %179 = vector.shape_cast %178 : vector<16xf32> to vector<16x1xf32>
    %cst_76 = arith.constant 1.280000e+02 : f32
    %180 = vector.broadcast %cst_76 : f32 to vector<16x1xf32>
    %181 = arith.divf %179, %180 : vector<16x1xf32>
    %182 = vector.broadcast %174 : vector<16x1xf32> to vector<16x128xf32>
    %183 = arith.subf %168, %182 : vector<16x128xf32>
    %cst_77 = arith.constant 9.99999974E-6 : f32
    %184 = vector.broadcast %cst_77 : f32 to vector<16x1xf32>
    %185 = arith.addf %181, %184 : vector<16x1xf32>
    %186 = math.rsqrt %185 : vector<16x1xf32>
    %187 = vector.broadcast %186 : vector<16x1xf32> to vector<16x128xf32>
    %188 = arith.mulf %183, %187 : vector<16x128xf32>
    %189 = vector.broadcast %169 : vector<1x128xf32> to vector<16x128xf32>
    %190 = arith.mulf %188, %189 : vector<16x128xf32>
    %191 = vector.broadcast %170 : vector<1x128xf32> to vector<16x128xf32>
    %192 = arith.addf %190, %191 : vector<16x128xf32>
    %c1_78 = arith.constant 1 : index
    %c0_79 = arith.constant 0 : index
    %c0_80 = arith.constant 0 : index
    %193 = vector.load %arg7[%c1_78, %c0_79, %c0_80] : memref<2x128x256xf32, #tpu.memory_space<vmem>>, vector<1x128x256xf32>
    %194 = vector.shape_cast %193 : vector<1x128x256xf32> to vector<128x256xf32>
    %cst_81 = arith.constant dense<0.000000e+00> : vector<16x256xf32>
    %195 = tpu.matmul %192, %194, %cst_81 {dimension_numbers = #tpu.dot_dimension_numbers<[1], [0], [0], [1], [0, 0, 1, 1], [], []>} : vector<16x128xf32>, vector<128x256xf32>, vector<16x256xf32> -> vector<16x256xf32>
    %c1_82 = arith.constant 1 : index
    %c0_83 = arith.constant 0 : index
    %c0_84 = arith.constant 0 : index
    %196 = vector.load %arg8[%c1_82, %c0_83, %c0_84] : memref<2x1x256xf32, #tpu.memory_space<vmem>>, vector<1x1x256xf32>
    %197 = vector.shape_cast %196 : vector<1x1x256xf32> to vector<1x256xf32>
    %198 = vector.broadcast %197 : vector<1x256xf32> to vector<16x256xf32>
    %199 = arith.addf %195, %198 : vector<16x256xf32>
    %200 = arith.mulf %199, %199 : vector<16x256xf32>
    %201 = arith.mulf %199, %200 : vector<16x256xf32>
    %cst_85 = arith.constant 4.471500e-02 : f32
    %202 = vector.broadcast %cst_85 : f32 to vector<16x256xf32>
    %203 = arith.mulf %202, %201 : vector<16x256xf32>
    %204 = arith.addf %199, %203 : vector<16x256xf32>
    %cst_86 = arith.constant 0.797884583 : f32
    %205 = vector.broadcast %cst_86 : f32 to vector<16x256xf32>
    %206 = arith.mulf %205, %204 : vector<16x256xf32>
    %207 = math.tanh %206 : vector<16x256xf32>
    %cst_87 = arith.constant 1.000000e+00 : f32
    %208 = vector.broadcast %cst_87 : f32 to vector<16x256xf32>
    %209 = arith.addf %208, %207 : vector<16x256xf32>
    %cst_88 = arith.constant 5.000000e-01 : f32
    %210 = vector.broadcast %cst_88 : f32 to vector<16x256xf32>
    %211 = arith.mulf %210, %209 : vector<16x256xf32>
    %212 = arith.mulf %199, %211 : vector<16x256xf32>
    %c1_89 = arith.constant 1 : index
    %c0_90 = arith.constant 0 : index
    %c0_91 = arith.constant 0 : index
    %213 = vector.load %arg9[%c1_89, %c0_90, %c0_91] : memref<2x256x128xf32, #tpu.memory_space<vmem>>, vector<1x256x128xf32>
    %214 = vector.shape_cast %213 : vector<1x256x128xf32> to vector<256x128xf32>
    %cst_92 = arith.constant dense<0.000000e+00> : vector<16x128xf32>
    %215 = tpu.matmul %212, %214, %cst_92 {dimension_numbers = #tpu.dot_dimension_numbers<[1], [0], [0], [1], [0, 0, 1, 1], [], []>} : vector<16x256xf32>, vector<256x128xf32>, vector<16x128xf32> -> vector<16x128xf32>
    %216 = vector.extract_strided_slice %161 {offsets = [3, 0], sizes = [1, 128], strides = [1, 1]} : vector<6x128xf32> to vector<1x128xf32>
    %217 = vector.broadcast %216 : vector<1x128xf32> to vector<16x128xf32>
    %218 = arith.addf %215, %217 : vector<16x128xf32>
    %219 = arith.addf %192, %218 : vector<16x128xf32>
    %220 = vector.extract_strided_slice %161 {offsets = [4, 0], sizes = [1, 128], strides = [1, 1]} : vector<6x128xf32> to vector<1x128xf32>
    %221 = vector.extract_strided_slice %161 {offsets = [5, 0], sizes = [1, 128], strides = [1, 1]} : vector<6x128xf32> to vector<1x128xf32>
    %cst_93 = arith.constant dense<0.000000e+00> : vector<16xf32>
    %222 = vector.multi_reduction <add>, %219, %cst_93 [1] : vector<16x128xf32> to vector<16xf32>
    %223 = vector.shape_cast %222 : vector<16xf32> to vector<16x1xf32>
    %cst_94 = arith.constant 1.280000e+02 : f32
    %224 = vector.broadcast %cst_94 : f32 to vector<16x1xf32>
    %225 = arith.divf %223, %224 : vector<16x1xf32>
    %226 = vector.broadcast %225 : vector<16x1xf32> to vector<16x128xf32>
    %227 = arith.subf %219, %226 : vector<16x128xf32>
    %228 = arith.mulf %227, %227 : vector<16x128xf32>
    %cst_95 = arith.constant dense<0.000000e+00> : vector<16xf32>
    %229 = vector.multi_reduction <add>, %228, %cst_95 [1] : vector<16x128xf32> to vector<16xf32>
    %230 = vector.shape_cast %229 : vector<16xf32> to vector<16x1xf32>
    %cst_96 = arith.constant 1.280000e+02 : f32
    %231 = vector.broadcast %cst_96 : f32 to vector<16x1xf32>
    %232 = arith.divf %230, %231 : vector<16x1xf32>
    %233 = vector.broadcast %225 : vector<16x1xf32> to vector<16x128xf32>
    %234 = arith.subf %219, %233 : vector<16x128xf32>
    %cst_97 = arith.constant 9.99999974E-6 : f32
    %235 = vector.broadcast %cst_97 : f32 to vector<16x1xf32>
    %236 = arith.addf %232, %235 : vector<16x1xf32>
    %237 = math.rsqrt %236 : vector<16x1xf32>
    %238 = vector.broadcast %237 : vector<16x1xf32> to vector<16x128xf32>
    %239 = arith.mulf %234, %238 : vector<16x128xf32>
    %240 = vector.broadcast %220 : vector<1x128xf32> to vector<16x128xf32>
    %241 = arith.mulf %239, %240 : vector<16x128xf32>
    %242 = vector.broadcast %221 : vector<1x128xf32> to vector<16x128xf32>
    %243 = arith.addf %241, %242 : vector<16x128xf32>
    %c0_98 = arith.constant 0 : index
    %c0_99 = arith.constant 0 : index
    %244 = vector.load %arg11[%c0_98, %c0_99] : memref<128x128xf32, #tpu.memory_space<vmem>>, vector<128x128xf32>
    %cst_100 = arith.constant dense<0.000000e+00> : vector<16x128xf32>
    %245 = tpu.matmul %243, %244, %cst_100 {dimension_numbers = #tpu.dot_dimension_numbers<[1], [0], [0], [1], [0, 0, 1, 1], [], []>} : vector<16x128xf32>, vector<128x128xf32>, vector<16x128xf32> -> vector<16x128xf32>
    %c2 = arith.constant 2 : index
    %c0_101 = arith.constant 0 : index
    %246 = vector.load %arg12[%c2, %c0_101] : memref<4x128xf32, #tpu.memory_space<vmem>>, vector<1x128xf32>
    %247 = vector.broadcast %246 : vector<1x128xf32> to vector<16x128xf32>
    %248 = arith.addf %245, %247 : vector<16x128xf32>
    %c0_102 = arith.constant 0 : index
    %c0_103 = arith.constant 0 : index
    %249 = vector.load %arg2[%c0_102, %c0_103] : memref<16x1xf32, #tpu.memory_space<vmem>>, vector<16x1xf32>
    %250 = vector.broadcast %249 : vector<16x1xf32> to vector<16x128xf32>
    %251 = arith.mulf %248, %250 : vector<16x128xf32>
    %252 = arith.mulf %251, %251 : vector<16x128xf32>
    %cst_104 = arith.constant dense<0.000000e+00> : vector<16xf32>
    %253 = vector.multi_reduction <add>, %252, %cst_104 [1] : vector<16x128xf32> to vector<16xf32>
    %254 = vector.shape_cast %253 : vector<16xf32> to vector<16x1xf32>
    %cst_105 = arith.constant 1.000000e-24 : f32
    %255 = vector.broadcast %cst_105 : f32 to vector<16x1xf32>
    %256 = arith.maximumf %254, %255 : vector<16x1xf32>
    %257 = math.rsqrt %256 : vector<16x1xf32>
    %258 = vector.broadcast %257 : vector<16x1xf32> to vector<16x128xf32>
    %259 = arith.mulf %251, %258 : vector<16x128xf32>
    %c0_106 = arith.constant 0 : index
    %c0_107 = arith.constant 0 : index
    %260 = vector.load %arg14[%c0_106, %c0_107] : memref<16x128xf32, #tpu.memory_space<vmem>>, vector<16x128xf32>
    tpu.vector_store %arg14[%c0_106, %c0_107], %259 {strides = array<i32>} : memref<16x128xf32, #tpu.memory_space<vmem>>, vector<16x128xf32>,
    %c3 = arith.constant 3 : index
    %c0_108 = arith.constant 0 : index
    %261 = vector.load %arg12[%c3, %c0_108] : memref<4x128xf32, #tpu.memory_space<vmem>>, vector<1x128xf32>
    %262 = vector.broadcast %261 : vector<1x128xf32> to vector<16x128xf32>
    %263 = arith.mulf %243, %262 : vector<16x128xf32>
    %cst_109 = arith.constant dense<0.000000e+00> : vector<16xf32>
    %264 = vector.multi_reduction <add>, %263, %cst_109 [1] : vector<16x128xf32> to vector<16xf32>
    %265 = vector.shape_cast %264 : vector<16xf32> to vector<16x1xf32>
    %c0_110 = arith.constant 0 : index
    %c0_111 = arith.constant 0 : index
    %266 = vector.load %arg13[%c0_110, %c0_111] : memref<1x1xf32, #tpu.memory_space<vmem>>, vector<1x1xf32>
    %267 = vector.broadcast %266 : vector<1x1xf32> to vector<16x1xf32>
    %268 = arith.addf %265, %267 : vector<16x1xf32>
    %cst_112 = arith.constant 0.000000e+00 : f32
    %269 = vector.broadcast %cst_112 : f32 to vector<16x1xf32>
    %270 = arith.maximumf %268, %269 : vector<16x1xf32>
    %c0_113 = arith.constant 0 : index
    %c0_114 = arith.constant 0 : index
    %271 = vector.load %arg3[%c0_113, %c0_114] : memref<16x128xf32, #tpu.memory_space<vmem>>, vector<16x128xf32>
    %272 = vector.broadcast %270 : vector<16x1xf32> to vector<16x128xf32>
    %273 = arith.mulf %271, %272 : vector<16x128xf32>
    %274 = vector.extract_strided_slice %243 {offsets = [0, 0], sizes = [1, 128], strides = [1, 1]} : vector<16x128xf32> to vector<1x128xf32>
    %275 = arith.mulf %274, %274 : vector<1x128xf32>
    %cst_115 = arith.constant dense<0.000000e+00> : vector<1xf32>
    %276 = vector.multi_reduction <add>, %275, %cst_115 [1] : vector<1x128xf32> to vector<1xf32>
    %277 = vector.shape_cast %276 : vector<1xf32> to vector<1x1xf32>
    %cst_116 = arith.constant 1.000000e-24 : f32
    %278 = vector.broadcast %cst_116 : f32 to vector<1x1xf32>
    %279 = arith.maximumf %277, %278 : vector<1x1xf32>
    %280 = math.rsqrt %279 : vector<1x1xf32>
    %281 = vector.broadcast %280 : vector<1x1xf32> to vector<1x128xf32>
    %282 = arith.mulf %274, %281 : vector<1x128xf32>
    %283 = vector.extract_strided_slice %273 {offsets = [0, 0], sizes = [8, 128], strides = [1, 1]} : vector<16x128xf32> to vector<8x128xf32>
    %cst_117 = arith.constant dense<0xFF800000> : vector<128xf32>
    %284 = vector.multi_reduction <maximumf>, %283, %cst_117 [0] : vector<8x128xf32> to vector<128xf32>
    %285 = vector.shape_cast %284 : vector<128xf32> to vector<1x128xf32>
    %286 = tpu.concatenate %282, %285 in 1 : vector<1x128xf32>, vector<1x128xf32> -> vector<1x256xf32>
    %287 = vector.extract_strided_slice %243 {offsets = [8, 0], sizes = [1, 128], strides = [1, 1]} : vector<16x128xf32> to vector<1x128xf32>
    %288 = arith.mulf %287, %287 : vector<1x128xf32>
    %cst_118 = arith.constant dense<0.000000e+00> : vector<1xf32>
    %289 = vector.multi_reduction <add>, %288, %cst_118 [1] : vector<1x128xf32> to vector<1xf32>
    %290 = vector.shape_cast %289 : vector<1xf32> to vector<1x1xf32>
    %cst_119 = arith.constant 1.000000e-24 : f32
    %291 = vector.broadcast %cst_119 : f32 to vector<1x1xf32>
    %292 = arith.maximumf %290, %291 : vector<1x1xf32>
    %293 = math.rsqrt %292 : vector<1x1xf32>
    %294 = vector.broadcast %293 : vector<1x1xf32> to vector<1x128xf32>
    %295 = arith.mulf %287, %294 : vector<1x128xf32>
    %296 = vector.extract_strided_slice %273 {offsets = [8, 0], sizes = [8, 128], strides = [1, 1]} : vector<16x128xf32> to vector<8x128xf32>
    %cst_120 = arith.constant dense<0xFF800000> : vector<128xf32>
    %297 = vector.multi_reduction <maximumf>, %296, %cst_120 [0] : vector<8x128xf32> to vector<128xf32>
    %298 = vector.shape_cast %297 : vector<128xf32> to vector<1x128xf32>
    %299 = tpu.concatenate %295, %298 in 1 : vector<1x128xf32>, vector<1x128xf32> -> vector<1x256xf32>
    %300 = tpu.concatenate %286, %299 in 0 : vector<1x256xf32>, vector<1x256xf32> -> vector<2x256xf32>
    %c0_121 = arith.constant 0 : index
    %c0_122 = arith.constant 0 : index
    %301 = vector.load %arg15[%c0_121, %c0_122] : memref<2x256xf32, #tpu.memory_space<vmem>>, vector<2x256xf32>
    tpu.vector_store %arg15[%c0_121, %c0_122], %300 {strides = array<i32>} : memref<2x256xf32, #tpu.memory_space<vmem>>, vector<2x256xf32>,
    return
  }
}

</mosaic_0001>

<llo_original>
// kernel: eq.1
$region0: #{eq.1}
  %s0 = inlined_call_operand.hbm [shape: s32[2,8], index: 0, kind: input, shape index: {}]
  %s1 = inlined_call_operand.vmem [shape: s32[16], index: 1, kind: output, shape index: {}]
  $region1: #{eq.1} parent=0
    #allocation0 [shape = 'u8[1024]{0}', space=vmem, size = 0x400, scoped, tag = 'operand span for operand 0']
    #allocation1 [shape = 's32[1]{0}', space=sflag, size = 0x4, scoped, tag = 'scoped memory for eq.1']
    #allocation2 [shape = 'u8[4096]{0}', space=vmem, size = 0x1000, scoped, tag = 'scoped mem for output reshape']
    #allocation3 [shape = 'u8[4096]{0}', space=vmem, size = 0x1000, scoped, tag = 'scoped mem for input reshape']
    %2 = vsyncpa [#allocation1], 0
    %s4 = ssub.s32 32, 32
    %5 = vsyncadd [#allocation1], %s4
    %s7 = sshll.u32 [#allocation0], 4
    %s8 = int_to_ptr.vmem [resolvable:$true] %s7
    %10 = dma.hbm_to_vmem [thread:$0]  %s0, 32, %s8, [#allocation1]
    %11 = dma.done [#allocation1], 32
    %s13 = sshll.u32 1, 2
    %s14 = ssub.s32 %s13, 1
    %v15 = vld [vmem:[#allocation0] sm:%s14]
    %16 = vst [vmem:[#allocation3] sm:%s14] %v15
    %v17 = vld [vmem:[#allocation3] sm:$0x1]
    %vm18 = vcmask 64512
    %19 = vst.msk [vmem:[#allocation2] sm:$0x1] %vm18, %v17
    %s20 = scalar_lea.vmem [#allocation3], 1
    %v21 = vld [vmem:[%s20] sm:$0x1]
    %22 = vrot.lane.b32.xlu0 %v21, 8
    %v23 = vpop.permute.xlu0 %22
    %vm24 = vcmask 130112
    %25 = vst.msk [vmem:[#allocation2] sm:$0x1] %vm24, %v23
    %s27 = sshll.u32 1, 1
    %s28 = ssub.s32 %s27, 1
    %v30 = vld [vmem:[#allocation2] sm:%s28]
    %s31 = sshll.u32 1, 1
    %s32 = ssub.s32 %s31, 1
    %33 = vst [vmem:[%s1] sm:%s32] %v30
    %34 = vsyncpa [#allocation1], 1

// kernel: _lambda_.1
$region0: #{_lambda_.1}
  #allocation0 [shape = 'u32[]', space=smem, size = 0x4, offset = 0x4, fixed_abs, tag = 'smem constant byte address 0x4 - core index']
  #allocation1 [shape = 'u32[144,128]{1,0:T(1,128)}', space=vmem, size = 0x12000, scoped, tag = 'internal scratch']
  #allocation2 [shape = 'f32[1,1]{1,0:T(1,128)S(1)}', space=vmem, size = 0x200, scoped, tag = 'scoped memory for _lambda_.1']
  %s0 = inlined_call_operand.vmem [shape: f32[16,128], index: 0, kind: input, shape index: {}]
  %s1 = inlined_call_operand.vmem [shape: f32[16,16], index: 1, kind: input, shape index: {}]
  %s2 = inlined_call_operand.vmem [shape: f32[16,1], index: 2, kind: input, shape index: {}]
  %s3 = inlined_call_operand.vmem [shape: f32[16,128], index: 3, kind: input, shape index: {}]
  %s4 = inlined_call_operand.hbm [shape: f32[2,128,384], index: 4, kind: input, shape index: {}]
  %s5 = inlined_call_operand.vmem [shape: f32[2,1,384], index: 5, kind: input, shape index: {}]
  %s6 = inlined_call_operand.vmem [shape: f32[2,128,128], index: 6, kind: input, shape index: {}]
  %s7 = inlined_call_operand.hbm [shape: f32[2,128,256], index: 7, kind: input, shape index: {}]
  %s8 = inlined_call_operand.vmem [shape: f32[2,1,256], index: 8, kind: input, shape index: {}]
  %s9 = inlined_call_operand.hbm [shape: f32[2,256,128], index: 9, kind: input, shape index: {}]
  %s10 = inlined_call_operand.vmem [shape: f32[2,6,128], index: 10, kind: input, shape index: {}]
  %s11 = inlined_call_operand.vmem [shape: f32[128,128], index: 11, kind: input, shape index: {}]
  %s12 = inlined_call_operand.vmem [shape: f32[4,128], index: 12, kind: input, shape index: {}]
  %s13 = inlined_call_operand.<no memory space> [shape: f32[1,1], index: 13, kind: input, shape index: {}]
  %s14 = inlined_call_operand.vmem [shape: f32[16,128], index: 14, kind: output, shape index: {0}]
  %s15 = inlined_call_operand.vmem [shape: f32[2,256], index: 15, kind: output, shape index: {1}]
  %16 = xla_tuple %s14, %s15
  %s17 = sld [smem:[#allocation0]]
  $region86: #{_lambda_.1} parent=0
    _
  %s19 = ssub.s32 1, %s17
  %s20 = scalar_select 0, %s19, %s17
  %v21 = vstv %s13
  %22 = vst [vmem:[#allocation2] sm:$0x1] %v21
  $region1: #{_lambda_.1} parent=0
    #allocation3 [shape = 'u8[393216]{0}', space=vmem, size = 0x60000, scoped, tag = 'input window, operand 4, single buffered']
    #allocation4 [shape = 's32[1]{0}', space=sflag, size = 0x4, scoped, tag = 'scoped memory for _lambda_.1']
    #allocation5 [shape = 'u8[262144]{0}', space=vmem, size = 0x40000, scoped, tag = 'input window, operand 7, single buffered']
    #allocation6 [shape = 's32[1]{0}', space=sflag, size = 0x4, scoped, tag = 'scoped memory for _lambda_.1']
    #allocation7 [shape = 'u8[262144]{0}', space=vmem, size = 0x40000, scoped, tag = 'input window, operand 9, single buffered']
    %23 = vsyncpa [#allocation4], 0
    %24 = vsyncpa [#allocation6], 0
    // Predicated region
    $region2: #{_lambda_.1} parent=1 // pred_check
      _
    $region3: #{_lambda_.1} parent=1 // pred_check_branch
      %26 = sbr.rel (0) target = $region5
    $region4: #{_lambda_.1} parent=1 // pred_region
      _
    $region5: #{_lambda_.1} parent=1 // pred_fallthru
      _
    // Predicated region
    $region6: #{_lambda_.1} parent=1 // pred_check
      _
    $region7: #{_lambda_.1} parent=1 // pred_check_branch
      %28 = sbr.rel (0) target = $region9
    $region8: #{_lambda_.1} parent=1 // pred_region
      _
    $region9: #{_lambda_.1} parent=1 // pred_fallthru
      _
    // Predicated region
    $region10: #{_lambda_.1} parent=1 // pred_check
      _
    $region11: #{_lambda_.1} parent=1 // pred_check_branch
      %30 = sbr.rel (0) target = $region13
    $region12: #{_lambda_.1} parent=1 // pred_region
      _
    $region13: #{_lambda_.1} parent=1 // pred_fallthru
      _
    // Predicated region
    $region14: #{_lambda_.1} parent=1 // pred_check
      _
    $region15: #{_lambda_.1} parent=1 // pred_check_branch
      %32 = sbr.rel (0) target = $region17
    $region16: #{_lambda_.1} parent=1 // pred_region
      _
    $region17: #{_lambda_.1} parent=1 // pred_fallthru
      _
    // Predicated region
    $region18: #{_lambda_.1} parent=1 // pred_check
      _
    $region19: #{_lambda_.1} parent=1 // pred_check_branch
      %34 = sbr.rel (0) target = $region21
    $region20: #{_lambda_.1} parent=1 // pred_region
      %s36 = ssub.s32 12288, 12288
      %37 = vsyncadd [#allocation4], %s36
      %s38 = sshll.u32 [#allocation3], 4
      %s39 = int_to_ptr.vmem [resolvable:$true] %s38
      %44 = dma.hbm_to_vmem [thread:$0]  %s4, 12288, %s39, [#allocation4], 384, 384, 24
    $region21: #{_lambda_.1} parent=1 // pred_fallthru
      _
    // Predicated region
    $region22: #{_lambda_.1} parent=1 // pred_check
      _
    $region23: #{_lambda_.1} parent=1 // pred_check_branch
      %46 = sbr.rel (0) target = $region25
    $region24: #{_lambda_.1} parent=1 // pred_region
      _
    $region25: #{_lambda_.1} parent=1 // pred_fallthru
      _
    // Predicated region
    $region26: #{_lambda_.1} parent=1 // pred_check
      _
    $region27: #{_lambda_.1} parent=1 // pred_check_branch
      %48 = sbr.rel (0) target = $region29
    $region28: #{_lambda_.1} parent=1 // pred_region
      _
    $region29: #{_lambda_.1} parent=1 // pred_fallthru
      _
    // Predicated region
    $region30: #{_lambda_.1} parent=1 // pred_check
      _
    $region31: #{_lambda_.1} parent=1 // pred_check_branch
      %50 = sbr.rel (0) target = $region33
    $region32: #{_lambda_.1} parent=1 // pred_region
      %s52 = ssub.s32 8192, 8192
      %53 = vsyncadd [#allocation6], %s52
      %s54 = sshll.u32 [#allocation5], 4
      %s55 = int_to_ptr.vmem [resolvable:$true] %s54
      %60 = dma.hbm_to_vmem [thread:$0]  %s7, 8192, %s55, [#allocation6], 256, 256, 16
    $region33: #{_lambda_.1} parent=1 // pred_fallthru
      _
    // Predicated region
    $region34: #{_lambda_.1} parent=1 // pred_check
      _
    $region35: #{_lambda_.1} parent=1 // pred_check_branch
      %62 = sbr.rel (0) target = $region37
    $region36: #{_lambda_.1} parent=1 // pred_region
      _
    $region37: #{_lambda_.1} parent=1 // pred_fallthru
      _
    // Predicated region
    $region38: #{_lambda_.1} parent=1 // pred_check
      _
    $region39: #{_lambda_.1} parent=1 // pred_check_branch
      %64 = sbr.rel (0) target = $region41
    $region40: #{_lambda_.1} parent=1 // pred_region
      %s66 = ssub.s32 8192, 8192
      %67 = vsyncadd [#allocation6], %s66
      %s68 = sshll.u32 [#allocation7], 4
      %s69 = int_to_ptr.vmem [resolvable:$true] %s68
      %74 = dma.hbm_to_vmem [thread:$0]  %s9, 8192, %s69, [#allocation6], 128, 128, 8
    $region41: #{_lambda_.1} parent=1 // pred_fallthru
      _
    // Predicated region
    $region42: #{_lambda_.1} parent=1 // pred_check
      _
    $region43: #{_lambda_.1} parent=1 // pred_check_branch
      %76 = sbr.rel (0) target = $region45
    $region44: #{_lambda_.1} parent=1 // pred_region
      _
    $region45: #{_lambda_.1} parent=1 // pred_fallthru
      _
    // Predicated region
    $region46: #{_lambda_.1} parent=1 // pred_check
      _
    $region47: #{_lambda_.1} parent=1 // pred_check_branch
      %78 = sbr.rel (0) target = $region49
    $region48: #{_lambda_.1} parent=1 // pred_region
      _
    $region49: #{_lambda_.1} parent=1 // pred_fallthru
      _
    // Predicated region
    $region50: #{_lambda_.1} parent=1 // pred_check
      _
    $region51: #{_lambda_.1} parent=1 // pred_check_branch
      %80 = sbr.rel (0) target = $region53
    $region52: #{_lambda_.1} parent=1 // pred_region
      _
    $region53: #{_lambda_.1} parent=1 // pred_fallthru
      _
    // Predicated region
    $region54: #{_lambda_.1} parent=1 // pred_check
      _
    $region55: #{_lambda_.1} parent=1 // pred_check_branch
      %82 = sbr.rel (0) target = $region57
    $region56: #{_lambda_.1} parent=1 // pred_region
      _
    $region57: #{_lambda_.1} parent=1 // pred_fallthru
      _
    // Predicated region
    $region58: #{_lambda_.1} parent=1 // pred_check
      _
    $region59: #{_lambda_.1} parent=1 // pred_check_branch
      %84 = sbr.rel (0) target = $region61
    $region60: #{_lambda_.1} parent=1 // pred_region
      %85 = dma.done [#allocation4], 12288
    $region61: #{_lambda_.1} parent=1 // pred_fallthru
      _
    // Predicated region
    $region62: #{_lambda_.1} parent=1 // pred_check
      _
    $region63: #{_lambda_.1} parent=1 // pred_check_branch
      %87 = sbr.rel (0) target = $region65
    $region64: #{_lambda_.1} parent=1 // pred_region
      %88 = dma.done [#allocation6], 8192
    $region65: #{_lambda_.1} parent=1 // pred_fallthru
      _
    // Predicated region
    $region66: #{_lambda_.1} parent=1 // pred_check
      _
    $region67: #{_lambda_.1} parent=1 // pred_check_branch
      %90 = sbr.rel (0) target = $region69
    $region68: #{_lambda_.1} parent=1 // pred_region
      %91 = dma.done [#allocation6], 8192
    $region69: #{_lambda_.1} parent=1 // pred_fallthru
      _
    %v92 = vld [vmem:[%s0] sm:$0xff]
    %v93 = vld [vmem:[%s0 + $0x8] sm:$0xff]
    %v94 = vld [vmem:[%s12] sm:$0x1]
    %v95 = vld [vmem:[%s12 + $0x1] sm:$0x1]
    %96 = vadd.xlane.f32.xlu0 %v92
    %v97 = vpop.xlane.xlu0 %96
    %98 = vadd.xlane.f32.xlu0 %v93
    %v99 = vpop.xlane.xlu0 %98
    %v100 = vrcp.pop 128.0
    %v101 = vmul.f32 %v97, %v100
    %v102 = vmul.f32 %v99, %v100
    %v103 = vsub.f32 %v92, %v101
    %v104 = vsub.f32 %v93, %v102
    %v105 = vmul.f32 %v103, %v103
    %v106 = vmul.f32 %v104, %v104
    %107 = vadd.xlane.f32.xlu0 %v105
    %v108 = vpop.xlane.xlu0 %107
    %109 = vadd.xlane.f32.xlu0 %v106
    %v110 = vpop.xlane.xlu0 %109
    %v111 = vmul.f32 %v108, %v100
    %v112 = vmul.f32 %v110, %v100
    %v113 = vadd.f32 %v111, 1e-05
    %v114 = vadd.f32 %v112, 1e-05
    %v115 = vrsqrt.pop %v113
    %v116 = vrsqrt.pop %v114
    %v117 = vmul.f32 %v103, %v115
    %v118 = vmul.f32 %v104, %v116
    %v119 = vlaneseq
    %v120 = vshrl.u32 %v119, 7
    %v121 = vsub.s32 0, %v120
    %v122 = vrot.slane %v94, %v121
    %v123 = vmul.f32 %v117, %v122
    %v124 = vmul.f32 %v118, %v122
    %v125 = vlaneseq
    %v126 = vshrl.u32 %v125, 7
    %v127 = vsub.s32 0, %v126
    %v128 = vrot.slane %v95, %v127
    %v129 = vadd.f32 %v123, %v128
    %v130 = vadd.f32 %v124, %v128
    %v131 = vld [vmem:[%s1] sm:$0xff]
    %v132 = vld [vmem:[%s1 + $0x8] sm:$0xff]
    %v133 = vld [vmem:[#allocation3] sm:$0xff]
    %v134 = vld [vmem:[#allocation3 + $0x8] sm:$0xff]
    %v135 = vld [vmem:[#allocation3 + $0x10] sm:$0xff]
    %v136 = vld [vmem:[#allocation3 + $0x18] sm:$0xff]
    %v137 = vld [vmem:[#allocation3 + $0x20] sm:$0xff]
    %v138 = vld [vmem:[#allocation3 + $0x28] sm:$0xff]
    %v139 = vld [vmem:[#allocation3 + $0x30] sm:$0xff]
    %v140 = vld [vmem:[#allocation3 + $0x38] sm:$0xff]
    %v141 = vld [vmem:[#allocation3 + $0x40] sm:$0xff]
    %v142 = vld [vmem:[#allocation3 + $0x48] sm:$0xff]
    %v143 = vld [vmem:[#allocation3 + $0x50] sm:$0xff]
    %v144 = vld [vmem:[#allocation3 + $0x58] sm:$0xff]
    %v145 = vld [vmem:[#allocation3 + $0x60] sm:$0xff]
    %v146 = vld [vmem:[#allocation3 + $0x68] sm:$0xff]
    %v147 = vld [vmem:[#allocation3 + $0x70] sm:$0xff]
    %v148 = vld [vmem:[#allocation3 + $0x78] sm:$0xff]
    %v149 = vld [vmem:[#allocation3 + $0x80] sm:$0xff]
    %v150 = vld [vmem:[#allocation3 + $0x88] sm:$0xff]
    %v151 = vld [vmem:[#allocation3 + $0x90] sm:$0xff]
    %v152 = vld [vmem:[#allocation3 + $0x98] sm:$0xff]
    %v153 = vld [vmem:[#allocation3 + $0xa0] sm:$0xff]
    %v154 = vld [vmem:[#allocation3 + $0xa8] sm:$0xff]
    %v155 = vld [vmem:[#allocation3 + $0xb0] sm:$0xff]
    %v156 = vld [vmem:[#allocation3 + $0xb8] sm:$0xff]
    %v157 = vld [vmem:[#allocation3 + $0xc0] sm:$0xff]
    %v158 = vld [vmem:[#allocation3 + $0xc8] sm:$0xff]
    %v159 = vld [vmem:[#allocation3 + $0xd0] sm:$0xff]
    %v160 = vld [vmem:[#allocation3 + $0xd8] sm:$0xff]
    %v161 = vld [vmem:[#allocation3 + $0xe0] sm:$0xff]
    %v162 = vld [vmem:[#allocation3 + $0xe8] sm:$0xff]
    %v163 = vld [vmem:[#allocation3 + $0xf0] sm:$0xff]
    %v164 = vld [vmem:[#allocation3 + $0xf8] sm:$0xff]
    %v165 = vld [vmem:[#allocation3 + $0x100] sm:$0xff]
    %v166 = vld [vmem:[#allocation3 + $0x108] sm:$0xff]
    %v167 = vld [vmem:[#allocation3 + $0x110] sm:$0xff]
    %v168 = vld [vmem:[#allocation3 + $0x118] sm:$0xff]
    %v169 = vld [vmem:[#allocation3 + $0x120] sm:$0xff]
    %v170 = vld [vmem:[#allocation3 + $0x128] sm:$0xff]
    %v171 = vld [vmem:[#allocation3 + $0x130] sm:$0xff]
    %v172 = vld [vmem:[#allocation3 + $0x138] sm:$0xff]
    %v173 = vld [vmem:[#allocation3 + $0x140] sm:$0xff]
    %v174 = vld [vmem:[#allocation3 + $0x148] sm:$0xff]
    %v175 = vld [vmem:[#allocation3 + $0x150] sm:$0xff]
    %v176 = vld [vmem:[#allocation3 + $0x158] sm:$0xff]
    %v177 = vld [vmem:[#allocation3 + $0x160] sm:$0xff]
    %v178 = vld [vmem:[#allocation3 + $0x168] sm:$0xff]
    %v179 = vld [vmem:[#allocation3 + $0x170] sm:$0xff]
    %v180 = vld [vmem:[#allocation3 + $0x178] sm:$0xff]
    %v181 = vld [vmem:[%s5] sm:$0x7]
    %v183 = vlaneseq
    %v184 = vshrl.u32 %v183, 7
    %v185 = vsub.s32 0, %v184
    %v186 = vrot.slane %v181, %v185
    %v187 = vlaneseq
    %v188 = vshrl.u32 %v187, 7
    %v189 = vsub.s32 1, %v188
    %v190 = vrot.slane %v181, %v189
    %v191 = vlaneseq
    %v192 = vshrl.u32 %v191, 7
    %v193 = vsub.s32 2, %v192
    %v194 = vrot.slane %v181, %v193
    %198 = vmatprep.subr.mxu0 %v179
    %199 = vmatpush1.msra.mxu0 %v178
    %200 = vmatprep.subr.mxu0 %v176
    %201 = vmatpush1.msra.mxu0 %v175
    %202 = vmatprep.subr.mxu0 %v173
    %203 = vmatpush1.msra.mxu0 %v172
    %204 = vmatprep.subr.mxu0 %v170
    %205 = vmatpush1.msra.mxu0 %v169
    %206 = vmatprep.subr.mxu0 %v167
    %207 = vmatpush1.msra.mxu0 %v166
    %208 = vmatprep.subr.mxu0 %v164
    %209 = vmatpush1.msra.mxu0 %v163
    %210 = vmatprep.subr.mxu0 %v161
    %211 = vmatpush1.msra.mxu0 %v160
    %212 = vmatprep.subr.mxu0 %v158
    %213 = vmatpush1.msra.mxu0 %v157
    %214 = vmatprep.subr.mxu0 %v155
    %215 = vmatpush1.msra.mxu0 %v154
    %216 = vmatprep.subr.mxu0 %v152
    %217 = vmatpush1.msra.mxu0 %v151
    %218 = vmatprep.subr.mxu0 %v149
    %219 = vmatpush1.msra.mxu0 %v148
    %220 = vmatprep.subr.mxu0 %v146
    %221 = vmatpush1.msra.mxu0 %v145
    %222 = vmatprep.subr.mxu0 %v143
    %223 = vmatpush1.msra.mxu0 %v142
    %224 = vmatprep.subr.mxu0 %v140
    %225 = vmatpush1.msra.mxu0 %v139
    %226 = vmatprep.subr.mxu0 %v137
    %227 = vmatpush1.msra.mxu0 %v136
    %228 = vmatprep.subr.mxu0 %v134
    %229 = vmatpush1.msra.mxu0 %v133
    %230 = vmatprep.subr.mxu0 0.0
    %231 = vmatpush2.msra.mxu0 0.0
    %232 = vmatprep.subr.mxu0 0.0
    %233 = vmatpush2.msra.mxu0 0.0
    %234 = vmatprep.subr.mxu0 0.0
    %235 = vmatpush2.msra.mxu0 0.0
    %236 = vmatprep.subr.mxu0 0.0
    %237 = vmatpush2.msra.mxu0 0.0
    %238 = vmatprep.subr.mxu0 0.0
    %239 = vmatpush2.msra.mxu0 0.0
    %240 = vmatprep.subr.mxu0 0.0
    %241 = vmatpush2.msra.mxu0 0.0
    %242 = vmatprep.subr.mxu0 0.0
    %243 = vmatpush2.msra.mxu0 0.0
    %244 = vmatprep.subr.mxu0 0.0
    %245 = vmatpush2.msra.mxu0 0.0
    %246 = vmatprep.subr.mxu0 0.0
    %247 = vmatpush2.msra.mxu0 0.0
    %248 = vmatprep.subr.mxu0 0.0
    %249 = vmatpush2.msra.mxu0 0.0
    %250 = vmatprep.subr.mxu0 0.0
    %251 = vmatpush2.msra.mxu0 0.0
    %252 = vmatprep.subr.mxu0 0.0
    %253 = vmatpush2.msra.mxu0 0.0
    %254 = vmatprep.subr.mxu0 0.0
    %255 = vmatpush2.msra.mxu0 0.0
    %256 = vmatprep.subr.mxu0 0.0
    %257 = vmatpush2.msra.mxu0 0.0
    %258 = vmatprep.subr.mxu0 0.0
    %259 = vmatpush2.msra.mxu0 0.0
    %260 = vmatprep.subr.mxu0 0.0
    %261 = vmatpush2.msra.mxu0 0.0
    %262 = vmatprep.mubr.f32.mxu0 0.0
    %263 = vmatmul.mubr.f32.gmra.mxu0 %v129
    %v264 = vpop.f32.mrf.mxu0
    %v265 = vadd.f32 %v186, %v264
    %v266 = vpop.f32.mrf.mxu0
    %v267 = vadd.f32 %v190, %v266
    %268 = vmatprep.mubr.f32.mxu0 0.0
    %269 = vmatmul.mubr.f32.gmra.mxu0 %v130
    %v270 = vpop.f32.mrf.mxu0
    %v271 = vadd.f32 %v186, %v270
    %v272 = vpop.f32.mrf.mxu0
    %v273 = vadd.f32 %v190, %v272
    %274 = vdwg.mxu0
    %275 = vmatprep.subr.mxu0 0.0
    %276 = vmatpush1.msra.mxu0 %v180
    %277 = vmatprep.subr.mxu0 0.0
    %278 = vmatpush1.msra.mxu0 %v177
    %279 = vmatprep.subr.mxu0 0.0
    %280 = vmatpush1.msra.mxu0 %v174
    %281 = vmatprep.subr.mxu0 0.0
    %282 = vmatpush1.msra.mxu0 %v171
    %283 = vmatprep.subr.mxu0 0.0
    %284 = vmatpush1.msra.mxu0 %v168
    %285 = vmatprep.subr.mxu0 0.0
    %286 = vmatpush1.msra.mxu0 %v165
    %287 = vmatprep.subr.mxu0 0.0
    %288 = vmatpush1.msra.mxu0 %v162
    %289 = vmatprep.subr.mxu0 0.0
    %290 = vmatpush1.msra.mxu0 %v159
    %291 = vmatprep.subr.mxu0 0.0
    %292 = vmatpush1.msra.mxu0 %v156
    %293 = vmatprep.subr.mxu0 0.0
    %294 = vmatpush1.msra.mxu0 %v153
    %295 = vmatprep.subr.mxu0 0.0
    %296 = vmatpush1.msra.mxu0 %v150
    %297 = vmatprep.subr.mxu0 0.0
    %298 = vmatpush1.msra.mxu0 %v147
    %299 = vmatprep.subr.mxu0 0.0
    %300 = vmatpush1.msra.mxu0 %v144
    %301 = vmatprep.subr.mxu0 0.0
    %302 = vmatpush1.msra.mxu0 %v141
    %303 = vmatprep.subr.mxu0 0.0
    %304 = vmatpush1.msra.mxu0 %v138
    %305 = vmatprep.subr.mxu0 0.0
    %306 = vmatpush1.msra.mxu0 %v135
    %307 = vmatprep.subr.mxu0 0.0
    %308 = vmatpush2.msra.mxu0 0.0
    %309 = vmatprep.subr.mxu0 0.0
    %310 = vmatpush2.msra.mxu0 0.0
    %311 = vmatprep.subr.mxu0 0.0
    %312 = vmatpush2.msra.mxu0 0.0
    %313 = vmatprep.subr.mxu0 0.0
    %314 = vmatpush2.msra.mxu0 0.0
    %315 = vmatprep.subr.mxu0 0.0
    %316 = vmatpush2.msra.mxu0 0.0
    %317 = vmatprep.subr.mxu0 0.0
    %318 = vmatpush2.msra.mxu0 0.0
    %319 = vmatprep.subr.mxu0 0.0
    %320 = vmatpush2.msra.mxu0 0.0
    %321 = vmatprep.subr.mxu0 0.0
    %322 = vmatpush2.msra.mxu0 0.0
    %323 = vmatprep.subr.mxu0 0.0
    %324 = vmatpush2.msra.mxu0 0.0
    %325 = vmatprep.subr.mxu0 0.0
    %326 = vmatpush2.msra.mxu0 0.0
    %327 = vmatprep.subr.mxu0 0.0
    %328 = vmatpush2.msra.mxu0 0.0
    %329 = vmatprep.subr.mxu0 0.0
    %330 = vmatpush2.msra.mxu0 0.0
    %331 = vmatprep.subr.mxu0 0.0
    %332 = vmatpush2.msra.mxu0 0.0
    %333 = vmatprep.subr.mxu0 0.0
    %334 = vmatpush2.msra.mxu0 0.0
    %335 = vmatprep.subr.mxu0 0.0
    %336 = vmatpush2.msra.mxu0 0.0
    %337 = vmatprep.subr.mxu0 0.0
    %338 = vmatpush2.msra.mxu0 0.0
    %339 = vmatprep.mubr.f32.mxu0 0.0
    %340 = vmatmul.mubr.f32.gmra.mxu0 %v129
    %v341 = vpop.f32.mrf.mxu0
    %v342 = vadd.f32 %v194, %v341
    %v343 = vpop.f32.mrf.mxu0
    %344 = vmatprep.mubr.f32.mxu0 0.0
    %345 = vmatmul.mubr.f32.gmra.mxu0 %v130
    %v346 = vpop.f32.mrf.mxu0
    %v347 = vadd.f32 %v194, %v346
    %v348 = vpop.f32.mrf.mxu0
    %349 = vdwg.mxu0
    %350 = vmatprep.subr.mxu0 0.0
    %351 = vmatpush1.xpose.msra.mxu0 0.0
    %352 = vmatprep.subr.mxu0 0.0
    %353 = vmatpush1.xpose.msra.mxu0 0.0
    %354 = vmatprep.subr.mxu0 0.0
    %355 = vmatpush1.xpose.msra.mxu0 0.0
    %356 = vmatprep.subr.mxu0 0.0
    %357 = vmatpush1.xpose.msra.mxu0 0.0
    %358 = vmatprep.subr.mxu0 0.0
    %359 = vmatpush1.xpose.msra.mxu0 0.0
    %360 = vmatprep.subr.mxu0 0.0
    %361 = vmatpush1.xpose.msra.mxu0 0.0
    %362 = vmatprep.subr.mxu0 0.0
    %363 = vmatpush1.xpose.msra.mxu0 0.0
    %364 = vmatprep.subr.mxu0 0.0
    %365 = vmatpush1.xpose.msra.mxu0 0.0
    %366 = vmatprep.subr.mxu0 0.0
    %367 = vmatpush1.xpose.msra.mxu0 0.0
    %368 = vmatprep.subr.mxu0 0.0
    %369 = vmatpush1.xpose.msra.mxu0 0.0
    %370 = vmatprep.subr.mxu0 0.0
    %371 = vmatpush1.xpose.msra.mxu0 0.0
    %372 = vmatprep.subr.mxu0 0.0
    %373 = vmatpush1.xpose.msra.mxu0 0.0
    %374 = vmatprep.subr.mxu0 0.0
    %375 = vmatpush1.xpose.msra.mxu0 0.0
    %376 = vmatprep.subr.mxu0 0.0
    %377 = vmatpush1.xpose.msra.mxu0 0.0
    %378 = vmatprep.subr.mxu0 0.0
    %379 = vmatpush1.xpose.msra.mxu0 %v273
    %380 = vmatprep.subr.mxu0 0.0
    %381 = vmatpush1.xpose.msra.mxu0 %v267
    %382 = vmatprep.subr.mxu0 0.0
    %383 = vmatpush2.xpose.msra.mxu0 0.0
    %384 = vmatprep.subr.mxu0 0.0
    %385 = vmatpush2.xpose.msra.mxu0 0.0
    %386 = vmatprep.subr.mxu0 0.0
    %387 = vmatpush2.xpose.msra.mxu0 0.0
    %388 = vmatprep.subr.mxu0 0.0
    %389 = vmatpush2.xpose.msra.mxu0 0.0
    %390 = vmatprep.subr.mxu0 0.0
    %391 = vmatpush2.xpose.msra.mxu0 0.0
    %392 = vmatprep.subr.mxu0 0.0
    %393 = vmatpush2.xpose.msra.mxu0 0.0
    %394 = vmatprep.subr.mxu0 0.0
    %395 = vmatpush2.xpose.msra.mxu0 0.0
    %396 = vmatprep.subr.mxu0 0.0
    %397 = vmatpush2.xpose.msra.mxu0 0.0
    %398 = vmatprep.subr.mxu0 0.0
    %399 = vmatpush2.xpose.msra.mxu0 0.0
    %400 = vmatprep.subr.mxu0 0.0
    %401 = vmatpush2.xpose.msra.mxu0 0.0
    %402 = vmatprep.subr.mxu0 0.0
    %403 = vmatpush2.xpose.msra.mxu0 0.0
    %404 = vmatprep.subr.mxu0 0.0
    %405 = vmatpush2.xpose.msra.mxu0 0.0
    %406 = vmatprep.subr.mxu0 0.0
    %407 = vmatpush2.xpose.msra.mxu0 0.0
    %408 = vmatprep.subr.mxu0 0.0
    %409 = vmatpush2.xpose.msra.mxu0 0.0
    %410 = vmatprep.subr.mxu0 0.0
    %411 = vmatpush2.xpose.msra.mxu0 0.0
    %412 = vmatprep.subr.mxu0 0.0
    %413 = vmatpush2.xpose.msra.mxu0 0.0
    %414 = vmatprep.mubr.f32.mxu0 0.0
    %415 = vmatmul.mubr.f32.gmra.mxu0 %v265
    %v416 = vpop.f32.mrf.mxu0
    %v417 = vadd.f32 0.0, %v416
    %v418 = vpop.f32.mrf.mxu0
    %419 = vmatprep.mubr.f32.mxu0 0.0
    %420 = vmatmul.mubr.f32.gmra.mxu0 %v271
    %v421 = vpop.f32.mrf.mxu0
    %v422 = vadd.f32 0.0, %v421
    %v423 = vpop.f32.mrf.mxu0
    %424 = vdwg.mxu0
    %v425 = vmul.f32 %v417, 0.088388346
    %v426 = vmul.f32 %v422, 0.088388346
    %v427 = vadd.f32 %v425, %v131
    %v428 = vadd.f32 %v426, %v132
    %vm429 = vcmask 130048
    %v430 = vsel %vm429, %v427, -inf
    %431 = vmax.xlane.f32.xlu0 %v430
    %v432 = vpop.xlane.xlu0 %431
    %v433 = vsel %vm429, %v428, -inf
    %434 = vmax.xlane.f32.xlu0 %v433
    %v435 = vpop.xlane.xlu0 %434
    %v436 = vsub.f32 %v427, %v432
    %v437 = vsub.f32 %v428, %v435
    %v438 = vmul.f32 %v436, 1.442695
    %v439 = vpow.pop %v438
    %v440 = vmul.f32 %v437, 1.442695
    %v441 = vpow.pop %v440
    %v442 = vsel %vm429, %v439, 0.0
    %443 = vadd.xlane.f32.xlu0 %v442
    %v444 = vpop.xlane.xlu0 %443
    %v445 = vsel %vm429, %v441, 0.0
    %446 = vadd.xlane.f32.xlu0 %v445
    %v447 = vpop.xlane.xlu0 %446
    %v448 = vrcp.pop %v444
    %v449 = vrcp.pop %v447
    %v450 = vmul.f32 %v439, %v448
    %v451 = vmul.f32 %v441, %v449
    %v453 = vsel %vm429, %v450, 0
    %v456 = vsel %vm429, %v451, 0
    %458 = vmatprep.subr.mxu0 0.0
    %459 = vmatpush1.msra.mxu0 0.0
    %460 = vmatprep.subr.mxu0 0.0
    %461 = vmatpush1.msra.mxu0 0.0
    %462 = vmatprep.subr.mxu0 0.0
    %463 = vmatpush1.msra.mxu0 0.0
    %464 = vmatprep.subr.mxu0 0.0
    %465 = vmatpush1.msra.mxu0 0.0
    %466 = vmatprep.subr.mxu0 0.0
    %467 = vmatpush1.msra.mxu0 0.0
    %468 = vmatprep.subr.mxu0 0.0
    %469 = vmatpush1.msra.mxu0 0.0
    %470 = vmatprep.subr.mxu0 0.0
    %471 = vmatpush1.msra.mxu0 0.0
    %472 = vmatprep.subr.mxu0 0.0
    %473 = vmatpush1.msra.mxu0 0.0
    %474 = vmatprep.subr.mxu0 0.0
    %475 = vmatpush1.msra.mxu0 0.0
    %476 = vmatprep.subr.mxu0 0.0
    %477 = vmatpush1.msra.mxu0 0.0
    %478 = vmatprep.subr.mxu0 0.0
    %479 = vmatpush1.msra.mxu0 0.0
    %480 = vmatprep.subr.mxu0 0.0
    %481 = vmatpush1.msra.mxu0 0.0
    %482 = vmatprep.subr.mxu0 0.0
    %483 = vmatpush1.msra.mxu0 0.0
    %484 = vmatprep.subr.mxu0 0.0
    %485 = vmatpush1.msra.mxu0 0.0
    %486 = vmatprep.subr.mxu0 0.0
    %487 = vmatpush1.msra.mxu0 %v347
    %488 = vmatprep.subr.mxu0 0.0
    %489 = vmatpush1.msra.mxu0 %v342
    %490 = vmatprep.subr.mxu0 0.0
    %491 = vmatpush2.msra.mxu0 0.0
    %492 = vmatprep.subr.mxu0 0.0
    %493 = vmatpush2.msra.mxu0 0.0
    %494 = vmatprep.subr.mxu0 0.0
    %495 = vmatpush2.msra.mxu0 0.0
    %496 = vmatprep.subr.mxu0 0.0
    %497 = vmatpush2.msra.mxu0 0.0
    %498 = vmatprep.subr.mxu0 0.0
    %499 = vmatpush2.msra.mxu0 0.0
    %500 = vmatprep.subr.mxu0 0.0
    %501 = vmatpush2.msra.mxu0 0.0
    %502 = vmatprep.subr.mxu0 0.0
    %503 = vmatpush2.msra.mxu0 0.0
    %504 = vmatprep.subr.mxu0 0.0
    %505 = vmatpush2.msra.mxu0 0.0
    %506 = vmatprep.subr.mxu0 0.0
    %507 = vmatpush2.msra.mxu0 0.0
    %508 = vmatprep.subr.mxu0 0.0
    %509 = vmatpush2.msra.mxu0 0.0
    %510 = vmatprep.subr.mxu0 0.0
    %511 = vmatpush2.msra.mxu0 0.0
    %512 = vmatprep.subr.mxu0 0.0
    %513 = vmatpush2.msra.mxu0 0.0
    %514 = vmatprep.subr.mxu0 0.0
    %515 = vmatpush2.msra.mxu0 0.0
    %516 = vmatprep.subr.mxu0 0.0
    %517 = vmatpush2.msra.mxu0 0.0
    %518 = vmatprep.subr.mxu0 0.0
    %519 = vmatpush2.msra.mxu0 0.0
    %520 = vmatprep.subr.mxu0 0.0
    %521 = vmatpush2.msra.mxu0 0.0
    %522 = vmatprep.mubr.f32.mxu0 0.0
    %523 = vmatmul.mubr.f32.gmra.mxu0 %v453
    %v524 = vpop.f32.mrf.mxu0
    %v525 = vadd.f32 0.0, %v524
    %v526 = vpop.f32.mrf.mxu0
    %527 = vmatprep.mubr.f32.mxu0 0.0
    %528 = vmatmul.mubr.f32.gmra.mxu0 %v456
    %v529 = vpop.f32.mrf.mxu0
    %v530 = vadd.f32 0.0, %v529
    %v531 = vpop.f32.mrf.mxu0
    %532 = vdwg.mxu0
    %v533 = vld [vmem:[%s10] sm:$0x3f]
    %v534 = vld [vmem:[%s6] sm:$0xff]
    %v535 = vld [vmem:[%s6 + $0x8] sm:$0xff]
    %v536 = vld [vmem:[%s6 + $0x10] sm:$0xff]
    %v537 = vld [vmem:[%s6 + $0x18] sm:$0xff]
    %v538 = vld [vmem:[%s6 + $0x20] sm:$0xff]
    %v539 = vld [vmem:[%s6 + $0x28] sm:$0xff]
    %v540 = vld [vmem:[%s6 + $0x30] sm:$0xff]
    %v541 = vld [vmem:[%s6 + $0x38] sm:$0xff]
    %v542 = vld [vmem:[%s6 + $0x40] sm:$0xff]
    %v543 = vld [vmem:[%s6 + $0x48] sm:$0xff]
    %v544 = vld [vmem:[%s6 + $0x50] sm:$0xff]
    %v545 = vld [vmem:[%s6 + $0x58] sm:$0xff]
    %v546 = vld [vmem:[%s6 + $0x60] sm:$0xff]
    %v547 = vld [vmem:[%s6 + $0x68] sm:$0xff]
    %v548 = vld [vmem:[%s6 + $0x70] sm:$0xff]
    %v549 = vld [vmem:[%s6 + $0x78] sm:$0xff]
    %v550 = vlaneseq
    %v551 = vshrl.u32 %v550, 7
    %v552 = vsub.s32 0, %v551
    %v553 = vrot.slane %v533, %v552
    %554 = vmatprep.subr.mxu0 0.0
    %555 = vmatpush1.msra.mxu0 %v549
    %556 = vmatprep.subr.mxu0 0.0
    %557 = vmatpush1.msra.mxu0 %v548
    %558 = vmatprep.subr.mxu0 0.0
    %559 = vmatpush1.msra.mxu0 %v547
    %560 = vmatprep.subr.mxu0 0.0
    %561 = vmatpush1.msra.mxu0 %v546
    %562 = vmatprep.subr.mxu0 0.0
    %563 = vmatpush1.msra.mxu0 %v545
    %564 = vmatprep.subr.mxu0 0.0
    %565 = vmatpush1.msra.mxu0 %v544
    %566 = vmatprep.subr.mxu0 0.0
    %567 = vmatpush1.msra.mxu0 %v543
    %568 = vmatprep.subr.mxu0 0.0
    %569 = vmatpush1.msra.mxu0 %v542
    %570 = vmatprep.subr.mxu0 0.0
    %571 = vmatpush1.msra.mxu0 %v541
    %572 = vmatprep.subr.mxu0 0.0
    %573 = vmatpush1.msra.mxu0 %v540
    %574 = vmatprep.subr.mxu0 0.0
    %575 = vmatpush1.msra.mxu0 %v539
    %576 = vmatprep.subr.mxu0 0.0
    %577 = vmatpush1.msra.mxu0 %v538
    %578 = vmatprep.subr.mxu0 0.0
    %579 = vmatpush1.msra.mxu0 %v537
    %580 = vmatprep.subr.mxu0 0.0
    %581 = vmatpush1.msra.mxu0 %v536
    %582 = vmatprep.subr.mxu0 0.0
    %583 = vmatpush1.msra.mxu0 %v535
    %584 = vmatprep.subr.mxu0 0.0
    %585 = vmatpush1.msra.mxu0 %v534
    %586 = vmatprep.subr.mxu0 0.0
    %587 = vmatpush2.msra.mxu0 0.0
    %588 = vmatprep.subr.mxu0 0.0
    %589 = vmatpush2.msra.mxu0 0.0
    %590 = vmatprep.subr.mxu0 0.0
    %591 = vmatpush2.msra.mxu0 0.0
    %592 = vmatprep.subr.mxu0 0.0
    %593 = vmatpush2.msra.mxu0 0.0
    %594 = vmatprep.subr.mxu0 0.0
    %595 = vmatpush2.msra.mxu0 0.0
    %596 = vmatprep.subr.mxu0 0.0
    %597 = vmatpush2.msra.mxu0 0.0
    %598 = vmatprep.subr.mxu0 0.0
    %599 = vmatpush2.msra.mxu0 0.0
    %600 = vmatprep.subr.mxu0 0.0
    %601 = vmatpush2.msra.mxu0 0.0
    %602 = vmatprep.subr.mxu0 0.0
    %603 = vmatpush2.msra.mxu0 0.0
    %604 = vmatprep.subr.mxu0 0.0
    %605 = vmatpush2.msra.mxu0 0.0
    %606 = vmatprep.subr.mxu0 0.0
    %607 = vmatpush2.msra.mxu0 0.0
    %608 = vmatprep.subr.mxu0 0.0
    %609 = vmatpush2.msra.mxu0 0.0
    %610 = vmatprep.subr.mxu0 0.0
    %611 = vmatpush2.msra.mxu0 0.0
    %612 = vmatprep.subr.mxu0 0.0
    %613 = vmatpush2.msra.mxu0 0.0
    %614 = vmatprep.subr.mxu0 0.0
    %615 = vmatpush2.msra.mxu0 0.0
    %616 = vmatprep.subr.mxu0 0.0
    %617 = vmatpush2.msra.mxu0 0.0
    %618 = vmatprep.mubr.f32.mxu0 0.0
    %619 = vmatmul.mubr.f32.gmra.mxu0 %v525
    %v620 = vpop.f32.mrf.mxu0
    %v621 = vadd.f32 %v553, %v620
    %v622 = vpop.f32.mrf.mxu0
    %623 = vmatprep.mubr.f32.mxu0 0.0
    %624 = vmatmul.mubr.f32.gmra.mxu0 %v530
    %v625 = vpop.f32.mrf.mxu0
    %v626 = vadd.f32 %v553, %v625
    %v627 = vpop.f32.mrf.mxu0
    %628 = vdwg.mxu0
    %v629 = vadd.f32 %v129, %v621
    %v630 = vadd.f32 %v130, %v626
    %631 = vadd.xlane.f32.xlu0 %v629
    %v632 = vpop.xlane.xlu0 %631
    %633 = vadd.xlane.f32.xlu0 %v630
    %v634 = vpop.xlane.xlu0 %633
    %v635 = vmul.f32 %v632, %v100
    %v636 = vmul.f32 %v634, %v100
    %v637 = vsub.f32 %v629, %v635
    %v638 = vsub.f32 %v630, %v636
    %v639 = vmul.f32 %v637, %v637
    %v640 = vmul.f32 %v638, %v638
    %641 = vadd.xlane.f32.xlu0 %v639
    %v642 = vpop.xlane.xlu0 %641
    %643 = vadd.xlane.f32.xlu0 %v640
    %v644 = vpop.xlane.xlu0 %643
    %v645 = vmul.f32 %v642, %v100
    %v646 = vmul.f32 %v644, %v100
    %v647 = vadd.f32 %v645, 1e-05
    %v648 = vadd.f32 %v646, 1e-05
    %v649 = vrsqrt.pop %v647
    %v650 = vrsqrt.pop %v648
    %v651 = vmul.f32 %v637, %v649
    %v652 = vmul.f32 %v638, %v650
    %v653 = vlaneseq
    %v654 = vshrl.u32 %v653, 7
    %v655 = vsub.s32 1, %v654
    %v656 = vrot.slane %v533, %v655
    %v657 = vmul.f32 %v651, %v656
    %v658 = vmul.f32 %v652, %v656
    %v659 = vlaneseq
    %v660 = vshrl.u32 %v659, 7
    %v661 = vsub.s32 2, %v660
    %v662 = vrot.slane %v533, %v661
    %v663 = vadd.f32 %v657, %v662
    %v664 = vadd.f32 %v658, %v662
    %v665 = vld [vmem:[#allocation5] sm:$0xff]
    %v666 = vld [vmem:[#allocation5 + $0x8] sm:$0xff]
    %v667 = vld [vmem:[#allocation5 + $0x10] sm:$0xff]
    %v668 = vld [vmem:[#allocation5 + $0x18] sm:$0xff]
    %v669 = vld [vmem:[#allocation5 + $0x20] sm:$0xff]
    %v670 = vld [vmem:[#allocation5 + $0x28] sm:$0xff]
    %v671 = vld [vmem:[#allocation5 + $0x30] sm:$0xff]
    %v672 = vld [vmem:[#allocation5 + $0x38] sm:$0xff]
    %v673 = vld [vmem:[#allocation5 + $0x40] sm:$0xff]
    %v674 = vld [vmem:[#allocation5 + $0x48] sm:$0xff]
    %v675 = vld [vmem:[#allocation5 + $0x50] sm:$0xff]
    %v676 = vld [vmem:[#allocation5 + $0x58] sm:$0xff]
    %v677 = vld [vmem:[#allocation5 + $0x60] sm:$0xff]
    %v678 = vld [vmem:[#allocation5 + $0x68] sm:$0xff]
    %v679 = vld [vmem:[#allocation5 + $0x70] sm:$0xff]
    %v680 = vld [vmem:[#allocation5 + $0x78] sm:$0xff]
    %v681 = vld [vmem:[#allocation5 + $0x80] sm:$0xff]
    %v682 = vld [vmem:[#allocation5 + $0x88] sm:$0xff]
    %v683 = vld [vmem:[#allocation5 + $0x90] sm:$0xff]
    %v684 = vld [vmem:[#allocation5 + $0x98] sm:$0xff]
    %v685 = vld [vmem:[#allocation5 + $0xa0] sm:$0xff]
    %v686 = vld [vmem:[#allocation5 + $0xa8] sm:$0xff]
    %v687 = vld [vmem:[#allocation5 + $0xb0] sm:$0xff]
    %v688 = vld [vmem:[#allocation5 + $0xb8] sm:$0xff]
    %v689 = vld [vmem:[#allocation5 + $0xc0] sm:$0xff]
    %v690 = vld [vmem:[#allocation5 + $0xc8] sm:$0xff]
    %v691 = vld [vmem:[#allocation5 + $0xd0] sm:$0xff]
    %v692 = vld [vmem:[#allocation5 + $0xd8] sm:$0xff]
    %v693 = vld [vmem:[#allocation5 + $0xe0] sm:$0xff]
    %v694 = vld [vmem:[#allocation5 + $0xe8] sm:$0xff]
    %v695 = vld [vmem:[#allocation5 + $0xf0] sm:$0xff]
    %v696 = vld [vmem:[#allocation5 + $0xf8] sm:$0xff]
    %v697 = vld [vmem:[%s8] sm:$0x3]
    %v699 = vlaneseq
    %v700 = vshrl.u32 %v699, 7
    %v701 = vsub.s32 0, %v700
    %v702 = vrot.slane %v697, %v701
    %v703 = vlaneseq
    %v704 = vshrl.u32 %v703, 7
    %v705 = vsub.s32 1, %v704
    %v706 = vrot.slane %v697, %v705
    %709 = vmatprep.subr.mxu0 %v696
    %710 = vmatpush1.msra.mxu0 %v695
    %711 = vmatprep.subr.mxu0 %v694
    %712 = vmatpush1.msra.mxu0 %v693
    %713 = vmatprep.subr.mxu0 %v692
    %714 = vmatpush1.msra.mxu0 %v691
    %715 = vmatprep.subr.mxu0 %v690
    %716 = vmatpush1.msra.mxu0 %v689
    %717 = vmatprep.subr.mxu0 %v688
    %718 = vmatpush1.msra.mxu0 %v687
    %719 = vmatprep.subr.mxu0 %v686
    %720 = vmatpush1.msra.mxu0 %v685
    %721 = vmatprep.subr.mxu0 %v684
    %722 = vmatpush1.msra.mxu0 %v683
    %723 = vmatprep.subr.mxu0 %v682
    %724 = vmatpush1.msra.mxu0 %v681
    %725 = vmatprep.subr.mxu0 %v680
    %726 = vmatpush1.msra.mxu0 %v679
    %727 = vmatprep.subr.mxu0 %v678
    %728 = vmatpush1.msra.mxu0 %v677
    %729 = vmatprep.subr.mxu0 %v676
    %730 = vmatpush1.msra.mxu0 %v675
    %731 = vmatprep.subr.mxu0 %v674
    %732 = vmatpush1.msra.mxu0 %v673
    %733 = vmatprep.subr.mxu0 %v672
    %734 = vmatpush1.msra.mxu0 %v671
    %735 = vmatprep.subr.mxu0 %v670
    %736 = vmatpush1.msra.mxu0 %v669
    %737 = vmatprep.subr.mxu0 %v668
    %738 = vmatpush1.msra.mxu0 %v667
    %739 = vmatprep.subr.mxu0 %v666
    %740 = vmatpush1.msra.mxu0 %v665
    %741 = vmatprep.subr.mxu0 0.0
    %742 = vmatpush2.msra.mxu0 0.0
    %743 = vmatprep.subr.mxu0 0.0
    %744 = vmatpush2.msra.mxu0 0.0
    %745 = vmatprep.subr.mxu0 0.0
    %746 = vmatpush2.msra.mxu0 0.0
    %747 = vmatprep.subr.mxu0 0.0
    %748 = vmatpush2.msra.mxu0 0.0
    %749 = vmatprep.subr.mxu0 0.0
    %750 = vmatpush2.msra.mxu0 0.0
    %751 = vmatprep.subr.mxu0 0.0
    %752 = vmatpush2.msra.mxu0 0.0
    %753 = vmatprep.subr.mxu0 0.0
    %754 = vmatpush2.msra.mxu0 0.0
    %755 = vmatprep.subr.mxu0 0.0
    %756 = vmatpush2.msra.mxu0 0.0
    %757 = vmatprep.subr.mxu0 0.0
    %758 = vmatpush2.msra.mxu0 0.0
    %759 = vmatprep.subr.mxu0 0.0
    %760 = vmatpush2.msra.mxu0 0.0
    %761 = vmatprep.subr.mxu0 0.0
    %762 = vmatpush2.msra.mxu0 0.0
    %763 = vmatprep.subr.mxu0 0.0
    %764 = vmatpush2.msra.mxu0 0.0
    %765 = vmatprep.subr.mxu0 0.0
    %766 = vmatpush2.msra.mxu0 0.0
    %767 = vmatprep.subr.mxu0 0.0
    %768 = vmatpush2.msra.mxu0 0.0
    %769 = vmatprep.subr.mxu0 0.0
    %770 = vmatpush2.msra.mxu0 0.0
    %771 = vmatprep.subr.mxu0 0.0
    %772 = vmatpush2.msra.mxu0 0.0
    %773 = vmatprep.mubr.f32.mxu0 0.0
    %774 = vmatmul.mubr.f32.gmra.mxu0 %v663
    %v775 = vpop.f32.mrf.mxu0
    %v776 = vadd.f32 %v702, %v775
    %v777 = vpop.f32.mrf.mxu0
    %v778 = vadd.f32 %v706, %v777
    %779 = vmatprep.mubr.f32.mxu0 0.0
    %780 = vmatmul.mubr.f32.gmra.mxu0 %v664
    %v781 = vpop.f32.mrf.mxu0
    %v782 = vadd.f32 %v702, %v781
    %v783 = vpop.f32.mrf.mxu0
    %v784 = vadd.f32 %v706, %v783
    %785 = vdwg.mxu0
    %v786 = vmul.f32 %v776, %v776
    %v787 = vmul.f32 %v778, %v778
    %v788 = vmul.f32 %v782, %v782
    %v789 = vmul.f32 %v784, %v784
    %v790 = vmul.f32 %v776, %v786
    %v791 = vmul.f32 %v778, %v787
    %v792 = vmul.f32 %v782, %v788
    %v793 = vmul.f32 %v784, %v789
    %v794 = vmul.f32 %v790, 0.044715
    %v795 = vmul.f32 %v791, 0.044715
    %v796 = vmul.f32 %v792, 0.044715
    %v797 = vmul.f32 %v793, 0.044715
    %v798 = vadd.f32 %v776, %v794
    %v799 = vadd.f32 %v778, %v795
    %v800 = vadd.f32 %v782, %v796
    %v801 = vadd.f32 %v784, %v797
    %v802 = vmul.f32 %v798, 0.7978846
    %v803 = vmul.f32 %v799, 0.7978846
    %v804 = vmul.f32 %v800, 0.7978846
    %v805 = vmul.f32 %v801, 0.7978846
    %v806 = vtanh.pop %v802
    %v807 = vtanh.pop %v803
    %v808 = vtanh.pop %v804
    %v809 = vtanh.pop %v805
    %v810 = vadd.f32 %v806, 1.0
    %v811 = vadd.f32 %v807, 1.0
    %v812 = vadd.f32 %v808, 1.0
    %v813 = vadd.f32 %v809, 1.0
    %v814 = vmul.f32 %v810, 0.5
    %v815 = vmul.f32 %v811, 0.5
    %v816 = vmul.f32 %v812, 0.5
    %v817 = vmul.f32 %v813, 0.5
    %v818 = vmul.f32 %v776, %v814
    %v819 = vmul.f32 %v778, %v815
    %v820 = vmul.f32 %v782, %v816
    %v821 = vmul.f32 %v784, %v817
    %v822 = vld [vmem:[#allocation7] sm:$0xff]
    %v823 = vld [vmem:[#allocation7 + $0x8] sm:$0xff]
    %v824 = vld [vmem:[#allocation7 + $0x10] sm:$0xff]
    %v825 = vld [vmem:[#allocation7 + $0x18] sm:$0xff]
    %v826 = vld [vmem:[#allocation7 + $0x20] sm:$0xff]
    %v827 = vld [vmem:[#allocation7 + $0x28] sm:$0xff]
    %v828 = vld [vmem:[#allocation7 + $0x30] sm:$0xff]
    %v829 = vld [vmem:[#allocation7 + $0x38] sm:$0xff]
    %v830 = vld [vmem:[#allocation7 + $0x40] sm:$0xff]
    %v831 = vld [vmem:[#allocation7 + $0x48] sm:$0xff]
    %v832 = vld [vmem:[#allocation7 + $0x50] sm:$0xff]
    %v833 = vld [vmem:[#allocation7 + $0x58] sm:$0xff]
    %v834 = vld [vmem:[#allocation7 + $0x60] sm:$0xff]
    %v835 = vld [vmem:[#allocation7 + $0x68] sm:$0xff]
    %v836 = vld [vmem:[#allocation7 + $0x70] sm:$0xff]
    %v837 = vld [vmem:[#allocation7 + $0x78] sm:$0xff]
    %v838 = vld [vmem:[#allocation7 + $0x80] sm:$0xff]
    %v839 = vld [vmem:[#allocation7 + $0x88] sm:$0xff]
    %v840 = vld [vmem:[#allocation7 + $0x90] sm:$0xff]
    %v841 = vld [vmem:[#allocation7 + $0x98] sm:$0xff]
    %v842 = vld [vmem:[#allocation7 + $0xa0] sm:$0xff]
    %v843 = vld [vmem:[#allocation7 + $0xa8] sm:$0xff]
    %v844 = vld [vmem:[#allocation7 + $0xb0] sm:$0xff]
    %v845 = vld [vmem:[#allocation7 + $0xb8] sm:$0xff]
    %v846 = vld [vmem:[#allocation7 + $0xc0] sm:$0xff]
    %v847 = vld [vmem:[#allocation7 + $0xc8] sm:$0xff]
    %v848 = vld [vmem:[#allocation7 + $0xd0] sm:$0xff]
    %v849 = vld [vmem:[#allocation7 + $0xd8] sm:$0xff]
    %v850 = vld [vmem:[#allocation7 + $0xe0] sm:$0xff]
    %v851 = vld [vmem:[#allocation7 + $0xe8] sm:$0xff]
    %v852 = vld [vmem:[#allocation7 + $0xf0] sm:$0xff]
    %v853 = vld [vmem:[#allocation7 + $0xf8] sm:$0xff]
    %v854 = vlaneseq
    %v855 = vshrl.u32 %v854, 7
    %v856 = vsub.s32 3, %v855
    %v857 = vrot.slane %v533, %v856
    %858 = vmatprep.subr.mxu0 0.0
    %859 = vmatpush1.msra.mxu0 %v837
    %860 = vmatprep.subr.mxu0 0.0
    %861 = vmatpush1.msra.mxu0 %v836
    %862 = vmatprep.subr.mxu0 0.0
    %863 = vmatpush1.msra.mxu0 %v835
    %864 = vmatprep.subr.mxu0 0.0
    %865 = vmatpush1.msra.mxu0 %v834
    %866 = vmatprep.subr.mxu0 0.0
    %867 = vmatpush1.msra.mxu0 %v833
    %868 = vmatprep.subr.mxu0 0.0
    %869 = vmatpush1.msra.mxu0 %v832
    %870 = vmatprep.subr.mxu0 0.0
    %871 = vmatpush1.msra.mxu0 %v831
    %872 = vmatprep.subr.mxu0 0.0
    %873 = vmatpush1.msra.mxu0 %v830
    %874 = vmatprep.subr.mxu0 0.0
    %875 = vmatpush1.msra.mxu0 %v829
    %876 = vmatprep.subr.mxu0 0.0
    %877 = vmatpush1.msra.mxu0 %v828
    %878 = vmatprep.subr.mxu0 0.0
    %879 = vmatpush1.msra.mxu0 %v827
    %880 = vmatprep.subr.mxu0 0.0
    %881 = vmatpush1.msra.mxu0 %v826
    %882 = vmatprep.subr.mxu0 0.0
    %883 = vmatpush1.msra.mxu0 %v825
    %884 = vmatprep.subr.mxu0 0.0
    %885 = vmatpush1.msra.mxu0 %v824
    %886 = vmatprep.subr.mxu0 0.0
    %887 = vmatpush1.msra.mxu0 %v823
    %888 = vmatprep.subr.mxu0 0.0
    %889 = vmatpush1.msra.mxu0 %v822
    %890 = vmatprep.subr.mxu0 0.0
    %891 = vmatpush2.msra.mxu0 %v853
    %892 = vmatprep.subr.mxu0 0.0
    %893 = vmatpush2.msra.mxu0 %v852
    %894 = vmatprep.subr.mxu0 0.0
    %895 = vmatpush2.msra.mxu0 %v851
    %896 = vmatprep.subr.mxu0 0.0
    %897 = vmatpush2.msra.mxu0 %v850
    %898 = vmatprep.subr.mxu0 0.0
    %899 = vmatpush2.msra.mxu0 %v849
    %900 = vmatprep.subr.mxu0 0.0
    %901 = vmatpush2.msra.mxu0 %v848
    %902 = vmatprep.subr.mxu0 0.0
    %903 = vmatpush2.msra.mxu0 %v847
    %904 = vmatprep.subr.mxu0 0.0
    %905 = vmatpush2.msra.mxu0 %v846
    %906 = vmatprep.subr.mxu0 0.0
    %907 = vmatpush2.msra.mxu0 %v845
    %908 = vmatprep.subr.mxu0 0.0
    %909 = vmatpush2.msra.mxu0 %v844
    %910 = vmatprep.subr.mxu0 0.0
    %911 = vmatpush2.msra.mxu0 %v843
    %912 = vmatprep.subr.mxu0 0.0
    %913 = vmatpush2.msra.mxu0 %v842
    %914 = vmatprep.subr.mxu0 0.0
    %915 = vmatpush2.msra.mxu0 %v841
    %916 = vmatprep.subr.mxu0 0.0
    %917 = vmatpush2.msra.mxu0 %v840
    %918 = vmatprep.subr.mxu0 0.0
    %919 = vmatpush2.msra.mxu0 %v839
    %920 = vmatprep.subr.mxu0 0.0
    %921 = vmatpush2.msra.mxu0 %v838
    %922 = vmatprep.mubr.f32.mxu0 %v819
    %923 = vmatmul.mubr.f32.gmra.mxu0 %v818
    %v924 = vpop.f32.mrf.mxu0
    %v925 = vadd.f32 %v857, %v924
    %v926 = vpop.f32.mrf.mxu0
    %927 = vmatprep.mubr.f32.mxu0 %v821
    %928 = vmatmul.mubr.f32.gmra.mxu0 %v820
    %v929 = vpop.f32.mrf.mxu0
    %v930 = vadd.f32 %v857, %v929
    %v931 = vpop.f32.mrf.mxu0
    %932 = vdwg.mxu0
    %v933 = vadd.f32 %v663, %v925
    %v934 = vadd.f32 %v664, %v930
    %935 = vadd.xlane.f32.xlu0 %v933
    %v936 = vpop.xlane.xlu0 %935
    %937 = vadd.xlane.f32.xlu0 %v934
    %v938 = vpop.xlane.xlu0 %937
    %v939 = vmul.f32 %v936, %v100
    %v940 = vmul.f32 %v938, %v100
    %v941 = vsub.f32 %v933, %v939
    %v942 = vsub.f32 %v934, %v940
    %v943 = vmul.f32 %v941, %v941
    %v944 = vmul.f32 %v942, %v942
    %945 = vadd.xlane.f32.xlu0 %v943
    %v946 = vpop.xlane.xlu0 %945
    %947 = vadd.xlane.f32.xlu0 %v944
    %v948 = vpop.xlane.xlu0 %947
    %v949 = vmul.f32 %v946, %v100
    %v950 = vmul.f32 %v948, %v100
    %v951 = vadd.f32 %v949, 1e-05
    %v952 = vadd.f32 %v950, 1e-05
    %v953 = vrsqrt.pop %v951
    %v954 = vrsqrt.pop %v952
    %v955 = vmul.f32 %v941, %v953
    %v956 = vmul.f32 %v942, %v954
    %v957 = vlaneseq
    %v958 = vshrl.u32 %v957, 7
    %v959 = vsub.s32 4, %v958
    %v960 = vrot.slane %v533, %v959
    %v961 = vmul.f32 %v955, %v960
    %v962 = vmul.f32 %v956, %v960
    %v963 = vlaneseq
    %v964 = vshrl.u32 %v963, 7
    %v965 = vsub.s32 5, %v964
    %v966 = vrot.slane %v533, %v965
    %v967 = vadd.f32 %v961, %v966
    %v968 = vadd.f32 %v962, %v966
    %s969 = scalar_lea.vmem [#allocation3], 384
    %v970 = vld [vmem:[%s969] sm:$0xff]
    %v971 = vld [vmem:[%s969 + $0x8] sm:$0xff]
    %v972 = vld [vmem:[%s969 + $0x10] sm:$0xff]
    %v973 = vld [vmem:[%s969 + $0x18] sm:$0xff]
    %v974 = vld [vmem:[%s969 + $0x20] sm:$0xff]
    %v975 = vld [vmem:[%s969 + $0x28] sm:$0xff]
    %v976 = vld [vmem:[%s969 + $0x30] sm:$0xff]
    %v977 = vld [vmem:[%s969 + $0x38] sm:$0xff]
    %v978 = vld [vmem:[%s969 + $0x40] sm:$0xff]
    %v979 = vld [vmem:[%s969 + $0x48] sm:$0xff]
    %v980 = vld [vmem:[%s969 + $0x50] sm:$0xff]
    %v981 = vld [vmem:[%s969 + $0x58] sm:$0xff]
    %v982 = vld [vmem:[%s969 + $0x60] sm:$0xff]
    %v983 = vld [vmem:[%s969 + $0x68] sm:$0xff]
    %v984 = vld [vmem:[%s969 + $0x70] sm:$0xff]
    %v985 = vld [vmem:[%s969 + $0x78] sm:$0xff]
    %v986 = vld [vmem:[%s969 + $0x80] sm:$0xff]
    %v987 = vld [vmem:[%s969 + $0x88] sm:$0xff]
    %v988 = vld [vmem:[%s969 + $0x90] sm:$0xff]
    %v989 = vld [vmem:[%s969 + $0x98] sm:$0xff]
    %v990 = vld [vmem:[%s969 + $0xa0] sm:$0xff]
    %v991 = vld [vmem:[%s969 + $0xa8] sm:$0xff]
    %v992 = vld [vmem:[%s969 + $0xb0] sm:$0xff]
    %v993 = vld [vmem:[%s969 + $0xb8] sm:$0xff]
    %v994 = vld [vmem:[%s969 + $0xc0] sm:$0xff]
    %v995 = vld [vmem:[%s969 + $0xc8] sm:$0xff]
    %v996 = vld [vmem:[%s969 + $0xd0] sm:$0xff]
    %v997 = vld [vmem:[%s969 + $0xd8] sm:$0xff]
    %v998 = vld [vmem:[%s969 + $0xe0] sm:$0xff]
    %v999 = vld [vmem:[%s969 + $0xe8] sm:$0xff]
    %v1000 = vld [vmem:[%s969 + $0xf0] sm:$0xff]
    %v1001 = vld [vmem:[%s969 + $0xf8] sm:$0xff]
    %v1002 = vld [vmem:[%s969 + $0x100] sm:$0xff]
    %v1003 = vld [vmem:[%s969 + $0x108] sm:$0xff]
    %v1004 = vld [vmem:[%s969 + $0x110] sm:$0xff]
    %v1005 = vld [vmem:[%s969 + $0x118] sm:$0xff]
    %v1006 = vld [vmem:[%s969 + $0x120] sm:$0xff]
    %v1007 = vld [vmem:[%s969 + $0x128] sm:$0xff]
    %v1008 = vld [vmem:[%s969 + $0x130] sm:$0xff]
    %v1009 = vld [vmem:[%s969 + $0x138] sm:$0xff]
    %v1010 = vld [vmem:[%s969 + $0x140] sm:$0xff]
    %v1011 = vld [vmem:[%s969 + $0x148] sm:$0xff]
    %v1012 = vld [vmem:[%s969 + $0x150] sm:$0xff]
    %v1013 = vld [vmem:[%s969 + $0x158] sm:$0xff]
    %v1014 = vld [vmem:[%s969 + $0x160] sm:$0xff]
    %v1015 = vld [vmem:[%s969 + $0x168] sm:$0xff]
    %v1016 = vld [vmem:[%s969 + $0x170] sm:$0xff]
    %v1017 = vld [vmem:[%s969 + $0x178] sm:$0xff]
    %s1018 = scalar_lea.vmem %s5, 3
    %v1019 = vld [vmem:[%s1018] sm:$0x7]
    %v1021 = vlaneseq
    %v1022 = vshrl.u32 %v1021, 7
    %v1023 = vsub.s32 0, %v1022
    %v1024 = vrot.slane %v1019, %v1023
    %v1025 = vlaneseq
    %v1026 = vshrl.u32 %v1025, 7
    %v1027 = vsub.s32 1, %v1026
    %v1028 = vrot.slane %v1019, %v1027
    %v1029 = vlaneseq
    %v1030 = vshrl.u32 %v1029, 7
    %v1031 = vsub.s32 2, %v1030
    %v1032 = vrot.slane %v1019, %v1031
    %1036 = vmatprep.subr.mxu0 %v1016
    %1037 = vmatpush1.msra.mxu0 %v1015
    %1038 = vmatprep.subr.mxu0 %v1013
    %1039 = vmatpush1.msra.mxu0 %v1012
    %1040 = vmatprep.subr.mxu0 %v1010
    %1041 = vmatpush1.msra.mxu0 %v1009
    %1042 = vmatprep.subr.mxu0 %v1007
    %1043 = vmatpush1.msra.mxu0 %v1006
    %1044 = vmatprep.subr.mxu0 %v1004
    %1045 = vmatpush1.msra.mxu0 %v1003
    %1046 = vmatprep.subr.mxu0 %v1001
    %1047 = vmatpush1.msra.mxu0 %v1000
    %1048 = vmatprep.subr.mxu0 %v998
    %1049 = vmatpush1.msra.mxu0 %v997
    %1050 = vmatprep.subr.mxu0 %v995
    %1051 = vmatpush1.msra.mxu0 %v994
    %1052 = vmatprep.subr.mxu0 %v992
    %1053 = vmatpush1.msra.mxu0 %v991
    %1054 = vmatprep.subr.mxu0 %v989
    %1055 = vmatpush1.msra.mxu0 %v988
    %1056 = vmatprep.subr.mxu0 %v986
    %1057 = vmatpush1.msra.mxu0 %v985
    %1058 = vmatprep.subr.mxu0 %v983
    %1059 = vmatpush1.msra.mxu0 %v982
    %1060 = vmatprep.subr.mxu0 %v980
    %1061 = vmatpush1.msra.mxu0 %v979
    %1062 = vmatprep.subr.mxu0 %v977
    %1063 = vmatpush1.msra.mxu0 %v976
    %1064 = vmatprep.subr.mxu0 %v974
    %1065 = vmatpush1.msra.mxu0 %v973
    %1066 = vmatprep.subr.mxu0 %v971
    %1067 = vmatpush1.msra.mxu0 %v970
    %1068 = vmatprep.subr.mxu0 0.0
    %1069 = vmatpush2.msra.mxu0 0.0
    %1070 = vmatprep.subr.mxu0 0.0
    %1071 = vmatpush2.msra.mxu0 0.0
    %1072 = vmatprep.subr.mxu0 0.0
    %1073 = vmatpush2.msra.mxu0 0.0
    %1074 = vmatprep.subr.mxu0 0.0
    %1075 = vmatpush2.msra.mxu0 0.0
    %1076 = vmatprep.subr.mxu0 0.0
    %1077 = vmatpush2.msra.mxu0 0.0
    %1078 = vmatprep.subr.mxu0 0.0
    %1079 = vmatpush2.msra.mxu0 0.0
    %1080 = vmatprep.subr.mxu0 0.0
    %1081 = vmatpush2.msra.mxu0 0.0
    %1082 = vmatprep.subr.mxu0 0.0
    %1083 = vmatpush2.msra.mxu0 0.0
    %1084 = vmatprep.subr.mxu0 0.0
    %1085 = vmatpush2.msra.mxu0 0.0
    %1086 = vmatprep.subr.mxu0 0.0
    %1087 = vmatpush2.msra.mxu0 0.0
    %1088 = vmatprep.subr.mxu0 0.0
    %1089 = vmatpush2.msra.mxu0 0.0
    %1090 = vmatprep.subr.mxu0 0.0
    %1091 = vmatpush2.msra.mxu0 0.0
    %1092 = vmatprep.subr.mxu0 0.0
    %1093 = vmatpush2.msra.mxu0 0.0
    %1094 = vmatprep.subr.mxu0 0.0
    %1095 = vmatpush2.msra.mxu0 0.0
    %1096 = vmatprep.subr.mxu0 0.0
    %1097 = vmatpush2.msra.mxu0 0.0
    %1098 = vmatprep.subr.mxu0 0.0
    %1099 = vmatpush2.msra.mxu0 0.0
    %1100 = vmatprep.mubr.f32.mxu0 0.0
    %1101 = vmatmul.mubr.f32.gmra.mxu0 %v967
    %v1102 = vpop.f32.mrf.mxu0
    %v1103 = vadd.f32 %v1024, %v1102
    %v1104 = vpop.f32.mrf.mxu0
    %v1105 = vadd.f32 %v1028, %v1104
    %1106 = vmatprep.mubr.f32.mxu0 0.0
    %1107 = vmatmul.mubr.f32.gmra.mxu0 %v968
    %v1108 = vpop.f32.mrf.mxu0
    %v1109 = vadd.f32 %v1024, %v1108
    %v1110 = vpop.f32.mrf.mxu0
    %v1111 = vadd.f32 %v1028, %v1110
    %1112 = vdwg.mxu0
    %1113 = vmatprep.subr.mxu0 0.0
    %1114 = vmatpush1.msra.mxu0 %v1017
    %1115 = vmatprep.subr.mxu0 0.0
    %1116 = vmatpush1.msra.mxu0 %v1014
    %1117 = vmatprep.subr.mxu0 0.0
    %1118 = vmatpush1.msra.mxu0 %v1011
    %1119 = vmatprep.subr.mxu0 0.0
    %1120 = vmatpush1.msra.mxu0 %v1008
    %1121 = vmatprep.subr.mxu0 0.0
    %1122 = vmatpush1.msra.mxu0 %v1005
    %1123 = vmatprep.subr.mxu0 0.0
    %1124 = vmatpush1.msra.mxu0 %v1002
    %1125 = vmatprep.subr.mxu0 0.0
    %1126 = vmatpush1.msra.mxu0 %v999
    %1127 = vmatprep.subr.mxu0 0.0
    %1128 = vmatpush1.msra.mxu0 %v996
    %1129 = vmatprep.subr.mxu0 0.0
    %1130 = vmatpush1.msra.mxu0 %v993
    %1131 = vmatprep.subr.mxu0 0.0
    %1132 = vmatpush1.msra.mxu0 %v990
    %1133 = vmatprep.subr.mxu0 0.0
    %1134 = vmatpush1.msra.mxu0 %v987
    %1135 = vmatprep.subr.mxu0 0.0
    %1136 = vmatpush1.msra.mxu0 %v984
    %1137 = vmatprep.subr.mxu0 0.0
    %1138 = vmatpush1.msra.mxu0 %v981
    %1139 = vmatprep.subr.mxu0 0.0
    %1140 = vmatpush1.msra.mxu0 %v978
    %1141 = vmatprep.subr.mxu0 0.0
    %1142 = vmatpush1.msra.mxu0 %v975
    %1143 = vmatprep.subr.mxu0 0.0
    %1144 = vmatpush1.msra.mxu0 %v972
    %1145 = vmatprep.subr.mxu0 0.0
    %1146 = vmatpush2.msra.mxu0 0.0
    %1147 = vmatprep.subr.mxu0 0.0
    %1148 = vmatpush2.msra.mxu0 0.0
    %1149 = vmatprep.subr.mxu0 0.0
    %1150 = vmatpush2.msra.mxu0 0.0
    %1151 = vmatprep.subr.mxu0 0.0
    %1152 = vmatpush2.msra.mxu0 0.0
    %1153 = vmatprep.subr.mxu0 0.0
    %1154 = vmatpush2.msra.mxu0 0.0
    %1155 = vmatprep.subr.mxu0 0.0
    %1156 = vmatpush2.msra.mxu0 0.0
    %1157 = vmatprep.subr.mxu0 0.0
    %1158 = vmatpush2.msra.mxu0 0.0
    %1159 = vmatprep.subr.mxu0 0.0
    %1160 = vmatpush2.msra.mxu0 0.0
    %1161 = vmatprep.subr.mxu0 0.0
    %1162 = vmatpush2.msra.mxu0 0.0
    %1163 = vmatprep.subr.mxu0 0.0
    %1164 = vmatpush2.msra.mxu0 0.0
    %1165 = vmatprep.subr.mxu0 0.0
    %1166 = vmatpush2.msra.mxu0 0.0
    %1167 = vmatprep.subr.mxu0 0.0
    %1168 = vmatpush2.msra.mxu0 0.0
    %1169 = vmatprep.subr.mxu0 0.0
    %1170 = vmatpush2.msra.mxu0 0.0
    %1171 = vmatprep.subr.mxu0 0.0
    %1172 = vmatpush2.msra.mxu0 0.0
    %1173 = vmatprep.subr.mxu0 0.0
    %1174 = vmatpush2.msra.mxu0 0.0
    %1175 = vmatprep.subr.mxu0 0.0
    %1176 = vmatpush2.msra.mxu0 0.0
    %1177 = vmatprep.mubr.f32.mxu0 0.0
    %1178 = vmatmul.mubr.f32.gmra.mxu0 %v967
    %v1179 = vpop.f32.mrf.mxu0
    %v1180 = vadd.f32 %v1032, %v1179
    %v1181 = vpop.f32.mrf.mxu0
    %1182 = vmatprep.mubr.f32.mxu0 0.0
    %1183 = vmatmul.mubr.f32.gmra.mxu0 %v968
    %v1184 = vpop.f32.mrf.mxu0
    %v1185 = vadd.f32 %v1032, %v1184
    %v1186 = vpop.f32.mrf.mxu0
    %1187 = vdwg.mxu0
    %1188 = vmatprep.subr.mxu0 0.0
    %1189 = vmatpush1.xpose.msra.mxu0 0.0
    %1190 = vmatprep.subr.mxu0 0.0
    %1191 = vmatpush1.xpose.msra.mxu0 0.0
    %1192 = vmatprep.subr.mxu0 0.0
    %1193 = vmatpush1.xpose.msra.mxu0 0.0
    %1194 = vmatprep.subr.mxu0 0.0
    %1195 = vmatpush1.xpose.msra.mxu0 0.0
    %1196 = vmatprep.subr.mxu0 0.0
    %1197 = vmatpush1.xpose.msra.mxu0 0.0
    %1198 = vmatprep.subr.mxu0 0.0
    %1199 = vmatpush1.xpose.msra.mxu0 0.0
    %1200 = vmatprep.subr.mxu0 0.0
    %1201 = vmatpush1.xpose.msra.mxu0 0.0
    %1202 = vmatprep.subr.mxu0 0.0
    %1203 = vmatpush1.xpose.msra.mxu0 0.0
    %1204 = vmatprep.subr.mxu0 0.0
    %1205 = vmatpush1.xpose.msra.mxu0 0.0
    %1206 = vmatprep.subr.mxu0 0.0
    %1207 = vmatpush1.xpose.msra.mxu0 0.0
    %1208 = vmatprep.subr.mxu0 0.0
    %1209 = vmatpush1.xpose.msra.mxu0 0.0
    %1210 = vmatprep.subr.mxu0 0.0
    %1211 = vmatpush1.xpose.msra.mxu0 0.0
    %1212 = vmatprep.subr.mxu0 0.0
    %1213 = vmatpush1.xpose.msra.mxu0 0.0
    %1214 = vmatprep.subr.mxu0 0.0
    %1215 = vmatpush1.xpose.msra.mxu0 0.0
    %1216 = vmatprep.subr.mxu0 0.0
    %1217 = vmatpush1.xpose.msra.mxu0 %v1111
    %1218 = vmatprep.subr.mxu0 0.0
    %1219 = vmatpush1.xpose.msra.mxu0 %v1105
    %1220 = vmatprep.subr.mxu0 0.0
    %1221 = vmatpush2.xpose.msra.mxu0 0.0
    %1222 = vmatprep.subr.mxu0 0.0
    %1223 = vmatpush2.xpose.msra.mxu0 0.0
    %1224 = vmatprep.subr.mxu0 0.0
    %1225 = vmatpush2.xpose.msra.mxu0 0.0
    %1226 = vmatprep.subr.mxu0 0.0
    %1227 = vmatpush2.xpose.msra.mxu0 0.0
    %1228 = vmatprep.subr.mxu0 0.0
    %1229 = vmatpush2.xpose.msra.mxu0 0.0
    %1230 = vmatprep.subr.mxu0 0.0
    %1231 = vmatpush2.xpose.msra.mxu0 0.0
    %1232 = vmatprep.subr.mxu0 0.0
    %1233 = vmatpush2.xpose.msra.mxu0 0.0
    %1234 = vmatprep.subr.mxu0 0.0
    %1235 = vmatpush2.xpose.msra.mxu0 0.0
    %1236 = vmatprep.subr.mxu0 0.0
    %1237 = vmatpush2.xpose.msra.mxu0 0.0
    %1238 = vmatprep.subr.mxu0 0.0
    %1239 = vmatpush2.xpose.msra.mxu0 0.0
    %1240 = vmatprep.subr.mxu0 0.0
    %1241 = vmatpush2.xpose.msra.mxu0 0.0
    %1242 = vmatprep.subr.mxu0 0.0
    %1243 = vmatpush2.xpose.msra.mxu0 0.0
    %1244 = vmatprep.subr.mxu0 0.0
    %1245 = vmatpush2.xpose.msra.mxu0 0.0
    %1246 = vmatprep.subr.mxu0 0.0
    %1247 = vmatpush2.xpose.msra.mxu0 0.0
    %1248 = vmatprep.subr.mxu0 0.0
    %1249 = vmatpush2.xpose.msra.mxu0 0.0
    %1250 = vmatprep.subr.mxu0 0.0
    %1251 = vmatpush2.xpose.msra.mxu0 0.0
    %1252 = vmatprep.mubr.f32.mxu0 0.0
    %1253 = vmatmul.mubr.f32.gmra.mxu0 %v1103
    %v1254 = vpop.f32.mrf.mxu0
    %v1255 = vadd.f32 0.0, %v1254
    %v1256 = vpop.f32.mrf.mxu0
    %1257 = vmatprep.mubr.f32.mxu0 0.0
    %1258 = vmatmul.mubr.f32.gmra.mxu0 %v1109
    %v1259 = vpop.f32.mrf.mxu0
    %v1260 = vadd.f32 0.0, %v1259
    %v1261 = vpop.f32.mrf.mxu0
    %1262 = vdwg.mxu0
    %v1263 = vmul.f32 %v1255, 0.088388346
    %v1264 = vmul.f32 %v1260, 0.088388346
    %v1265 = vadd.f32 %v1263, %v131
    %v1266 = vadd.f32 %v1264, %v132
    %v1267 = vsel %vm429, %v1265, -inf
    %1268 = vmax.xlane.f32.xlu0 %v1267
    %v1269 = vpop.xlane.xlu0 %1268
    %v1270 = vsel %vm429, %v1266, -inf
    %1271 = vmax.xlane.f32.xlu0 %v1270
    %v1272 = vpop.xlane.xlu0 %1271
    %v1273 = vsub.f32 %v1265, %v1269
    %v1274 = vsub.f32 %v1266, %v1272
    %v1275 = vmul.f32 %v1273, 1.442695
    %v1276 = vpow.pop %v1275
    %v1277 = vmul.f32 %v1274, 1.442695
    %v1278 = vpow.pop %v1277
    %v1279 = vsel %vm429, %v1276, 0.0
    %1280 = vadd.xlane.f32.xlu0 %v1279
    %v1281 = vpop.xlane.xlu0 %1280
    %v1282 = vsel %vm429, %v1278, 0.0
    %1283 = vadd.xlane.f32.xlu0 %v1282
    %v1284 = vpop.xlane.xlu0 %1283
    %v1285 = vrcp.pop %v1281
    %v1286 = vrcp.pop %v1284
    %v1287 = vmul.f32 %v1276, %v1285
    %v1288 = vmul.f32 %v1278, %v1286
    %v1290 = vsel %vm429, %v1287, 0
    %v1293 = vsel %vm429, %v1288, 0
    %1295 = vmatprep.subr.mxu0 0.0
    %1296 = vmatpush1.msra.mxu0 0.0
    %1297 = vmatprep.subr.mxu0 0.0
    %1298 = vmatpush1.msra.mxu0 0.0
    %1299 = vmatprep.subr.mxu0 0.0
    %1300 = vmatpush1.msra.mxu0 0.0
    %1301 = vmatprep.subr.mxu0 0.0
    %1302 = vmatpush1.msra.mxu0 0.0
    %1303 = vmatprep.subr.mxu0 0.0
    %1304 = vmatpush1.msra.mxu0 0.0
    %1305 = vmatprep.subr.mxu0 0.0
    %1306 = vmatpush1.msra.mxu0 0.0
    %1307 = vmatprep.subr.mxu0 0.0
    %1308 = vmatpush1.msra.mxu0 0.0
    %1309 = vmatprep.subr.mxu0 0.0
    %1310 = vmatpush1.msra.mxu0 0.0
    %1311 = vmatprep.subr.mxu0 0.0
    %1312 = vmatpush1.msra.mxu0 0.0
    %1313 = vmatprep.subr.mxu0 0.0
    %1314 = vmatpush1.msra.mxu0 0.0
    %1315 = vmatprep.subr.mxu0 0.0
    %1316 = vmatpush1.msra.mxu0 0.0
    %1317 = vmatprep.subr.mxu0 0.0
    %1318 = vmatpush1.msra.mxu0 0.0
    %1319 = vmatprep.subr.mxu0 0.0
    %1320 = vmatpush1.msra.mxu0 0.0
    %1321 = vmatprep.subr.mxu0 0.0
    %1322 = vmatpush1.msra.mxu0 0.0
    %1323 = vmatprep.subr.mxu0 0.0
    %1324 = vmatpush1.msra.mxu0 %v1185
    %1325 = vmatprep.subr.mxu0 0.0
    %1326 = vmatpush1.msra.mxu0 %v1180
    %1327 = vmatprep.subr.mxu0 0.0
    %1328 = vmatpush2.msra.mxu0 0.0
    %1329 = vmatprep.subr.mxu0 0.0
    %1330 = vmatpush2.msra.mxu0 0.0
    %1331 = vmatprep.subr.mxu0 0.0
    %1332 = vmatpush2.msra.mxu0 0.0
    %1333 = vmatprep.subr.mxu0 0.0
    %1334 = vmatpush2.msra.mxu0 0.0
    %1335 = vmatprep.subr.mxu0 0.0
    %1336 = vmatpush2.msra.mxu0 0.0
    %1337 = vmatprep.subr.mxu0 0.0
    %1338 = vmatpush2.msra.mxu0 0.0
    %1339 = vmatprep.subr.mxu0 0.0
    %1340 = vmatpush2.msra.mxu0 0.0
    %1341 = vmatprep.subr.mxu0 0.0
    %1342 = vmatpush2.msra.mxu0 0.0
    %1343 = vmatprep.subr.mxu0 0.0
    %1344 = vmatpush2.msra.mxu0 0.0
    %1345 = vmatprep.subr.mxu0 0.0
    %1346 = vmatpush2.msra.mxu0 0.0
    %1347 = vmatprep.subr.mxu0 0.0
    %1348 = vmatpush2.msra.mxu0 0.0
    %1349 = vmatprep.subr.mxu0 0.0
    %1350 = vmatpush2.msra.mxu0 0.0
    %1351 = vmatprep.subr.mxu0 0.0
    %1352 = vmatpush2.msra.mxu0 0.0
    %1353 = vmatprep.subr.mxu0 0.0
    %1354 = vmatpush2.msra.mxu0 0.0
    %1355 = vmatprep.subr.mxu0 0.0
    %1356 = vmatpush2.msra.mxu0 0.0
    %1357 = vmatprep.subr.mxu0 0.0
    %1358 = vmatpush2.msra.mxu0 0.0
    %1359 = vmatprep.mubr.f32.mxu0 0.0
    %1360 = vmatmul.mubr.f32.gmra.mxu0 %v1290
    %v1361 = vpop.f32.mrf.mxu0
    %v1362 = vadd.f32 0.0, %v1361
    %v1363 = vpop.f32.mrf.mxu0
    %1364 = vmatprep.mubr.f32.mxu0 0.0
    %1365 = vmatmul.mubr.f32.gmra.mxu0 %v1293
    %v1366 = vpop.f32.mrf.mxu0
    %v1367 = vadd.f32 0.0, %v1366
    %v1368 = vpop.f32.mrf.mxu0
    %1369 = vdwg.mxu0
    %s1370 = scalar_lea.vmem %s10, 8
    %v1371 = vld [vmem:[%s1370] sm:$0x3f]
    %s1372 = scalar_lea.vmem %s6, 128
    %v1373 = vld [vmem:[%s1372] sm:$0xff]
    %v1374 = vld [vmem:[%s1372 + $0x8] sm:$0xff]
    %v1375 = vld [vmem:[%s1372 + $0x10] sm:$0xff]
    %v1376 = vld [vmem:[%s1372 + $0x18] sm:$0xff]
    %v1377 = vld [vmem:[%s1372 + $0x20] sm:$0xff]
    %v1378 = vld [vmem:[%s1372 + $0x28] sm:$0xff]
    %v1379 = vld [vmem:[%s1372 + $0x30] sm:$0xff]
    %v1380 = vld [vmem:[%s1372 + $0x38] sm:$0xff]
    %v1381 = vld [vmem:[%s1372 + $0x40] sm:$0xff]
    %v1382 = vld [vmem:[%s1372 + $0x48] sm:$0xff]
    %v1383 = vld [vmem:[%s1372 + $0x50] sm:$0xff]
    %v1384 = vld [vmem:[%s1372 + $0x58] sm:$0xff]
    %v1385 = vld [vmem:[%s1372 + $0x60] sm:$0xff]
    %v1386 = vld [vmem:[%s1372 + $0x68] sm:$0xff]
    %v1387 = vld [vmem:[%s1372 + $0x70] sm:$0xff]
    %v1388 = vld [vmem:[%s1372 + $0x78] sm:$0xff]
    %v1389 = vlaneseq
    %v1390 = vshrl.u32 %v1389, 7
    %v1391 = vsub.s32 0, %v1390
    %v1392 = vrot.slane %v1371, %v1391
    %1393 = vmatprep.subr.mxu0 0.0
    %1394 = vmatpush1.msra.mxu0 %v1388
    %1395 = vmatprep.subr.mxu0 0.0
    %1396 = vmatpush1.msra.mxu0 %v1387
    %1397 = vmatprep.subr.mxu0 0.0
    %1398 = vmatpush1.msra.mxu0 %v1386
    %1399 = vmatprep.subr.mxu0 0.0
    %1400 = vmatpush1.msra.mxu0 %v1385
    %1401 = vmatprep.subr.mxu0 0.0
    %1402 = vmatpush1.msra.mxu0 %v1384
    %1403 = vmatprep.subr.mxu0 0.0
    %1404 = vmatpush1.msra.mxu0 %v1383
    %1405 = vmatprep.subr.mxu0 0.0
    %1406 = vmatpush1.msra.mxu0 %v1382
    %1407 = vmatprep.subr.mxu0 0.0
    %1408 = vmatpush1.msra.mxu0 %v1381
    %1409 = vmatprep.subr.mxu0 0.0
    %1410 = vmatpush1.msra.mxu0 %v1380
    %1411 = vmatprep.subr.mxu0 0.0
    %1412 = vmatpush1.msra.mxu0 %v1379
    %1413 = vmatprep.subr.mxu0 0.0
    %1414 = vmatpush1.msra.mxu0 %v1378
    %1415 = vmatprep.subr.mxu0 0.0
    %1416 = vmatpush1.msra.mxu0 %v1377
    %1417 = vmatprep.subr.mxu0 0.0
    %1418 = vmatpush1.msra.mxu0 %v1376
    %1419 = vmatprep.subr.mxu0 0.0
    %1420 = vmatpush1.msra.mxu0 %v1375
    %1421 = vmatprep.subr.mxu0 0.0
    %1422 = vmatpush1.msra.mxu0 %v1374
    %1423 = vmatprep.subr.mxu0 0.0
    %1424 = vmatpush1.msra.mxu0 %v1373
    %1425 = vmatprep.subr.mxu0 0.0
    %1426 = vmatpush2.msra.mxu0 0.0
    %1427 = vmatprep.subr.mxu0 0.0
    %1428 = vmatpush2.msra.mxu0 0.0
    %1429 = vmatprep.subr.mxu0 0.0
    %1430 = vmatpush2.msra.mxu0 0.0
    %1431 = vmatprep.subr.mxu0 0.0
    %1432 = vmatpush2.msra.mxu0 0.0
    %1433 = vmatprep.subr.mxu0 0.0
    %1434 = vmatpush2.msra.mxu0 0.0
    %1435 = vmatprep.subr.mxu0 0.0
    %1436 = vmatpush2.msra.mxu0 0.0
    %1437 = vmatprep.subr.mxu0 0.0
    %1438 = vmatpush2.msra.mxu0 0.0
    %1439 = vmatprep.subr.mxu0 0.0
    %1440 = vmatpush2.msra.mxu0 0.0
    %1441 = vmatprep.subr.mxu0 0.0
    %1442 = vmatpush2.msra.mxu0 0.0
    %1443 = vmatprep.subr.mxu0 0.0
    %1444 = vmatpush2.msra.mxu0 0.0
    %1445 = vmatprep.subr.mxu0 0.0
    %1446 = vmatpush2.msra.mxu0 0.0
    %1447 = vmatprep.subr.mxu0 0.0
    %1448 = vmatpush2.msra.mxu0 0.0
    %1449 = vmatprep.subr.mxu0 0.0
    %1450 = vmatpush2.msra.mxu0 0.0
    %1451 = vmatprep.subr.mxu0 0.0
    %1452 = vmatpush2.msra.mxu0 0.0
    %1453 = vmatprep.subr.mxu0 0.0
    %1454 = vmatpush2.msra.mxu0 0.0
    %1455 = vmatprep.subr.mxu0 0.0
    %1456 = vmatpush2.msra.mxu0 0.0
    %1457 = vmatprep.mubr.f32.mxu0 0.0
    %1458 = vmatmul.mubr.f32.gmra.mxu0 %v1362
    %v1459 = vpop.f32.mrf.mxu0
    %v1460 = vadd.f32 %v1392, %v1459
    %v1461 = vpop.f32.mrf.mxu0
    %1462 = vmatprep.mubr.f32.mxu0 0.0
    %1463 = vmatmul.mubr.f32.gmra.mxu0 %v1367
    %v1464 = vpop.f32.mrf.mxu0
    %v1465 = vadd.f32 %v1392, %v1464
    %v1466 = vpop.f32.mrf.mxu0
    %1467 = vdwg.mxu0
    %v1468 = vadd.f32 %v967, %v1460
    %v1469 = vadd.f32 %v968, %v1465
    %1470 = vadd.xlane.f32.xlu0 %v1468
    %v1471 = vpop.xlane.xlu0 %1470
    %1472 = vadd.xlane.f32.xlu0 %v1469
    %v1473 = vpop.xlane.xlu0 %1472
    %v1474 = vmul.f32 %v1471, %v100
    %v1475 = vmul.f32 %v1473, %v100
    %v1476 = vsub.f32 %v1468, %v1474
    %v1477 = vsub.f32 %v1469, %v1475
    %v1478 = vmul.f32 %v1476, %v1476
    %v1479 = vmul.f32 %v1477, %v1477
    %1480 = vadd.xlane.f32.xlu0 %v1478
    %v1481 = vpop.xlane.xlu0 %1480
    %1482 = vadd.xlane.f32.xlu0 %v1479
    %v1483 = vpop.xlane.xlu0 %1482
    %v1484 = vmul.f32 %v1481, %v100
    %v1485 = vmul.f32 %v1483, %v100
    %v1486 = vadd.f32 %v1484, 1e-05
    %v1487 = vadd.f32 %v1485, 1e-05
    %v1488 = vrsqrt.pop %v1486
    %v1489 = vrsqrt.pop %v1487
    %v1490 = vmul.f32 %v1476, %v1488
    %v1491 = vmul.f32 %v1477, %v1489
    %v1492 = vlaneseq
    %v1493 = vshrl.u32 %v1492, 7
    %v1494 = vsub.s32 1, %v1493
    %v1495 = vrot.slane %v1371, %v1494
    %v1496 = vmul.f32 %v1490, %v1495
    %v1497 = vmul.f32 %v1491, %v1495
    %v1498 = vlaneseq
    %v1499 = vshrl.u32 %v1498, 7
    %v1500 = vsub.s32 2, %v1499
    %v1501 = vrot.slane %v1371, %v1500
    %v1502 = vadd.f32 %v1496, %v1501
    %v1503 = vadd.f32 %v1497, %v1501
    %s1504 = scalar_lea.vmem [#allocation5], 256
    %v1505 = vld [vmem:[%s1504] sm:$0xff]
    %v1506 = vld [vmem:[%s1504 + $0x8] sm:$0xff]
    %v1507 = vld [vmem:[%s1504 + $0x10] sm:$0xff]
    %v1508 = vld [vmem:[%s1504 + $0x18] sm:$0xff]
    %v1509 = vld [vmem:[%s1504 + $0x20] sm:$0xff]
    %v1510 = vld [vmem:[%s1504 + $0x28] sm:$0xff]
    %v1511 = vld [vmem:[%s1504 + $0x30] sm:$0xff]
    %v1512 = vld [vmem:[%s1504 + $0x38] sm:$0xff]
    %v1513 = vld [vmem:[%s1504 + $0x40] sm:$0xff]
    %v1514 = vld [vmem:[%s1504 + $0x48] sm:$0xff]
    %v1515 = vld [vmem:[%s1504 + $0x50] sm:$0xff]
    %v1516 = vld [vmem:[%s1504 + $0x58] sm:$0xff]
    %v1517 = vld [vmem:[%s1504 + $0x60] sm:$0xff]
    %v1518 = vld [vmem:[%s1504 + $0x68] sm:$0xff]
    %v1519 = vld [vmem:[%s1504 + $0x70] sm:$0xff]
    %v1520 = vld [vmem:[%s1504 + $0x78] sm:$0xff]
    %v1521 = vld [vmem:[%s1504 + $0x80] sm:$0xff]
    %v1522 = vld [vmem:[%s1504 + $0x88] sm:$0xff]
    %v1523 = vld [vmem:[%s1504 + $0x90] sm:$0xff]
    %v1524 = vld [vmem:[%s1504 + $0x98] sm:$0xff]
    %v1525 = vld [vmem:[%s1504 + $0xa0] sm:$0xff]
    %v1526 = vld [vmem:[%s1504 + $0xa8] sm:$0xff]
    %v1527 = vld [vmem:[%s1504 + $0xb0] sm:$0xff]
    %v1528 = vld [vmem:[%s1504 + $0xb8] sm:$0xff]
    %v1529 = vld [vmem:[%s1504 + $0xc0] sm:$0xff]
    %v1530 = vld [vmem:[%s1504 + $0xc8] sm:$0xff]
    %v1531 = vld [vmem:[%s1504 + $0xd0] sm:$0xff]
    %v1532 = vld [vmem:[%s1504 + $0xd8] sm:$0xff]
    %v1533 = vld [vmem:[%s1504 + $0xe0] sm:$0xff]
    %v1534 = vld [vmem:[%s1504 + $0xe8] sm:$0xff]
    %v1535 = vld [vmem:[%s1504 + $0xf0] sm:$0xff]
    %v1536 = vld [vmem:[%s1504 + $0xf8] sm:$0xff]
    %s1537 = scalar_lea.vmem %s8, 2
    %v1538 = vld [vmem:[%s1537] sm:$0x3]
    %v1540 = vlaneseq
    %v1541 = vshrl.u32 %v1540, 7
    %v1542 = vsub.s32 0, %v1541
    %v1543 = vrot.slane %v1538, %v1542
    %v1544 = vlaneseq
    %v1545 = vshrl.u32 %v1544, 7
    %v1546 = vsub.s32 1, %v1545
    %v1547 = vrot.slane %v1538, %v1546
    %1550 = vmatprep.subr.mxu0 %v1536
    %1551 = vmatpush1.msra.mxu0 %v1535
    %1552 = vmatprep.subr.mxu0 %v1534
    %1553 = vmatpush1.msra.mxu0 %v1533
    %1554 = vmatprep.subr.mxu0 %v1532
    %1555 = vmatpush1.msra.mxu0 %v1531
    %1556 = vmatprep.subr.mxu0 %v1530
    %1557 = vmatpush1.msra.mxu0 %v1529
    %1558 = vmatprep.subr.mxu0 %v1528
    %1559 = vmatpush1.msra.mxu0 %v1527
    %1560 = vmatprep.subr.mxu0 %v1526
    %1561 = vmatpush1.msra.mxu0 %v1525
    %1562 = vmatprep.subr.mxu0 %v1524
    %1563 = vmatpush1.msra.mxu0 %v1523
    %1564 = vmatprep.subr.mxu0 %v1522
    %1565 = vmatpush1.msra.mxu0 %v1521
    %1566 = vmatprep.subr.mxu0 %v1520
    %1567 = vmatpush1.msra.mxu0 %v1519
    %1568 = vmatprep.subr.mxu0 %v1518
    %1569 = vmatpush1.msra.mxu0 %v1517
    %1570 = vmatprep.subr.mxu0 %v1516
    %1571 = vmatpush1.msra.mxu0 %v1515
    %1572 = vmatprep.subr.mxu0 %v1514
    %1573 = vmatpush1.msra.mxu0 %v1513
    %1574 = vmatprep.subr.mxu0 %v1512
    %1575 = vmatpush1.msra.mxu0 %v1511
    %1576 = vmatprep.subr.mxu0 %v1510
    %1577 = vmatpush1.msra.mxu0 %v1509
    %1578 = vmatprep.subr.mxu0 %v1508
    %1579 = vmatpush1.msra.mxu0 %v1507
    %1580 = vmatprep.subr.mxu0 %v1506
    %1581 = vmatpush1.msra.mxu0 %v1505
    %1582 = vmatprep.subr.mxu0 0.0
    %1583 = vmatpush2.msra.mxu0 0.0
    %1584 = vmatprep.subr.mxu0 0.0
    %1585 = vmatpush2.msra.mxu0 0.0
    %1586 = vmatprep.subr.mxu0 0.0
    %1587 = vmatpush2.msra.mxu0 0.0
    %1588 = vmatprep.subr.mxu0 0.0
    %1589 = vmatpush2.msra.mxu0 0.0
    %1590 = vmatprep.subr.mxu0 0.0
    %1591 = vmatpush2.msra.mxu0 0.0
    %1592 = vmatprep.subr.mxu0 0.0
    %1593 = vmatpush2.msra.mxu0 0.0
    %1594 = vmatprep.subr.mxu0 0.0
    %1595 = vmatpush2.msra.mxu0 0.0
    %1596 = vmatprep.subr.mxu0 0.0
    %1597 = vmatpush2.msra.mxu0 0.0
    %1598 = vmatprep.subr.mxu0 0.0
    %1599 = vmatpush2.msra.mxu0 0.0
    %1600 = vmatprep.subr.mxu0 0.0
    %1601 = vmatpush2.msra.mxu0 0.0
    %1602 = vmatprep.subr.mxu0 0.0
    %1603 = vmatpush2.msra.mxu0 0.0
    %1604 = vmatprep.subr.mxu0 0.0
    %1605 = vmatpush2.msra.mxu0 0.0
    %1606 = vmatprep.subr.mxu0 0.0
    %1607 = vmatpush2.msra.mxu0 0.0
    %1608 = vmatprep.subr.mxu0 0.0
    %1609 = vmatpush2.msra.mxu0 0.0
    %1610 = vmatprep.subr.mxu0 0.0
    %1611 = vmatpush2.msra.mxu0 0.0
    %1612 = vmatprep.subr.mxu0 0.0
    %1613 = vmatpush2.msra.mxu0 0.0
    %1614 = vmatprep.mubr.f32.mxu0 0.0
    %1615 = vmatmul.mubr.f32.gmra.mxu0 %v1502
    %v1616 = vpop.f32.mrf.mxu0
    %v1617 = vadd.f32 %v1543, %v1616
    %v1618 = vpop.f32.mrf.mxu0
    %v1619 = vadd.f32 %v1547, %v1618
    %1620 = vmatprep.mubr.f32.mxu0 0.0
    %1621 = vmatmul.mubr.f32.gmra.mxu0 %v1503
    %v1622 = vpop.f32.mrf.mxu0
    %v1623 = vadd.f32 %v1543, %v1622
    %v1624 = vpop.f32.mrf.mxu0
    %v1625 = vadd.f32 %v1547, %v1624
    %1626 = vdwg.mxu0
    %v1627 = vmul.f32 %v1617, %v1617
    %v1628 = vmul.f32 %v1619, %v1619
    %v1629 = vmul.f32 %v1623, %v1623
    %v1630 = vmul.f32 %v1625, %v1625
    %v1631 = vmul.f32 %v1617, %v1627
    %v1632 = vmul.f32 %v1619, %v1628
    %v1633 = vmul.f32 %v1623, %v1629
    %v1634 = vmul.f32 %v1625, %v1630
    %v1635 = vmul.f32 %v1631, 0.044715
    %v1636 = vmul.f32 %v1632, 0.044715
    %v1637 = vmul.f32 %v1633, 0.044715
    %v1638 = vmul.f32 %v1634, 0.044715
    %v1639 = vadd.f32 %v1617, %v1635
    %v1640 = vadd.f32 %v1619, %v1636
    %v1641 = vadd.f32 %v1623, %v1637
    %v1642 = vadd.f32 %v1625, %v1638
    %v1643 = vmul.f32 %v1639, 0.7978846
    %v1644 = vmul.f32 %v1640, 0.7978846
    %v1645 = vmul.f32 %v1641, 0.7978846
    %v1646 = vmul.f32 %v1642, 0.7978846
    %v1647 = vtanh.pop %v1643
    %v1648 = vtanh.pop %v1644
    %v1649 = vtanh.pop %v1645
    %v1650 = vtanh.pop %v1646
    %v1651 = vadd.f32 %v1647, 1.0
    %v1652 = vadd.f32 %v1648, 1.0
    %v1653 = vadd.f32 %v1649, 1.0
    %v1654 = vadd.f32 %v1650, 1.0
    %v1655 = vmul.f32 %v1651, 0.5
    %v1656 = vmul.f32 %v1652, 0.5
    %v1657 = vmul.f32 %v1653, 0.5
    %v1658 = vmul.f32 %v1654, 0.5
    %v1659 = vmul.f32 %v1617, %v1655
    %v1660 = vmul.f32 %v1619, %v1656
    %v1661 = vmul.f32 %v1623, %v1657
    %v1662 = vmul.f32 %v1625, %v1658
    %s1663 = scalar_lea.vmem [#allocation7], 256
    %v1664 = vld [vmem:[%s1663] sm:$0xff]
    %v1665 = vld [vmem:[%s1663 + $0x8] sm:$0xff]
    %v1666 = vld [vmem:[%s1663 + $0x10] sm:$0xff]
    %v1667 = vld [vmem:[%s1663 + $0x18] sm:$0xff]
    %v1668 = vld [vmem:[%s1663 + $0x20] sm:$0xff]
    %v1669 = vld [vmem:[%s1663 + $0x28] sm:$0xff]
    %v1670 = vld [vmem:[%s1663 + $0x30] sm:$0xff]
    %v1671 = vld [vmem:[%s1663 + $0x38] sm:$0xff]
    %v1672 = vld [vmem:[%s1663 + $0x40] sm:$0xff]
    %v1673 = vld [vmem:[%s1663 + $0x48] sm:$0xff]
    %v1674 = vld [vmem:[%s1663 + $0x50] sm:$0xff]
    %v1675 = vld [vmem:[%s1663 + $0x58] sm:$0xff]
    %v1676 = vld [vmem:[%s1663 + $0x60] sm:$0xff]
    %v1677 = vld [vmem:[%s1663 + $0x68] sm:$0xff]
    %v1678 = vld [vmem:[%s1663 + $0x70] sm:$0xff]
    %v1679 = vld [vmem:[%s1663 + $0x78] sm:$0xff]
    %v1680 = vld [vmem:[%s1663 + $0x80] sm:$0xff]
    %v1681 = vld [vmem:[%s1663 + $0x88] sm:$0xff]
    %v1682 = vld [vmem:[%s1663 + $0x90] sm:$0xff]
    %v1683 = vld [vmem:[%s1663 + $0x98] sm:$0xff]
    %v1684 = vld [vmem:[%s1663 + $0xa0] sm:$0xff]
    %v1685 = vld [vmem:[%s1663 + $0xa8] sm:$0xff]
    %v1686 = vld [vmem:[%s1663 + $0xb0] sm:$0xff]
    %v1687 = vld [vmem:[%s1663 + $0xb8] sm:$0xff]
    %v1688 = vld [vmem:[%s1663 + $0xc0] sm:$0xff]
    %v1689 = vld [vmem:[%s1663 + $0xc8] sm:$0xff]
    %v1690 = vld [vmem:[%s1663 + $0xd0] sm:$0xff]
    %v1691 = vld [vmem:[%s1663 + $0xd8] sm:$0xff]
    %v1692 = vld [vmem:[%s1663 + $0xe0] sm:$0xff]
    %v1693 = vld [vmem:[%s1663 + $0xe8] sm:$0xff]
    %v1694 = vld [vmem:[%s1663 + $0xf0] sm:$0xff]
    %v1695 = vld [vmem:[%s1663 + $0xf8] sm:$0xff]
    %v1696 = vlaneseq
    %v1697 = vshrl.u32 %v1696, 7
    %v1698 = vsub.s32 3, %v1697
    %v1699 = vrot.slane %v1371, %v1698
    %1700 = vmatprep.subr.mxu0 0.0
    %1701 = vmatpush1.msra.mxu0 %v1679
    %1702 = vmatprep.subr.mxu0 0.0
    %1703 = vmatpush1.msra.mxu0 %v1678
    %1704 = vmatprep.subr.mxu0 0.0
    %1705 = vmatpush1.msra.mxu0 %v1677
    %1706 = vmatprep.subr.mxu0 0.0
    %1707 = vmatpush1.msra.mxu0 %v1676
    %1708 = vmatprep.subr.mxu0 0.0
    %1709 = vmatpush1.msra.mxu0 %v1675
    %1710 = vmatprep.subr.mxu0 0.0
    %1711 = vmatpush1.msra.mxu0 %v1674
    %1712 = vmatprep.subr.mxu0 0.0
    %1713 = vmatpush1.msra.mxu0 %v1673
    %1714 = vmatprep.subr.mxu0 0.0
    %1715 = vmatpush1.msra.mxu0 %v1672
    %1716 = vmatprep.subr.mxu0 0.0
    %1717 = vmatpush1.msra.mxu0 %v1671
    %1718 = vmatprep.subr.mxu0 0.0
    %1719 = vmatpush1.msra.mxu0 %v1670
    %1720 = vmatprep.subr.mxu0 0.0
    %1721 = vmatpush1.msra.mxu0 %v1669
    %1722 = vmatprep.subr.mxu0 0.0
    %1723 = vmatpush1.msra.mxu0 %v1668
    %1724 = vmatprep.subr.mxu0 0.0
    %1725 = vmatpush1.msra.mxu0 %v1667
    %1726 = vmatprep.subr.mxu0 0.0
    %1727 = vmatpush1.msra.mxu0 %v1666
    %1728 = vmatprep.subr.mxu0 0.0
    %1729 = vmatpush1.msra.mxu0 %v1665
    %1730 = vmatprep.subr.mxu0 0.0
    %1731 = vmatpush1.msra.mxu0 %v1664
    %1732 = vmatprep.subr.mxu0 0.0
    %1733 = vmatpush2.msra.mxu0 %v1695
    %1734 = vmatprep.subr.mxu0 0.0
    %1735 = vmatpush2.msra.mxu0 %v1694
    %1736 = vmatprep.subr.mxu0 0.0
    %1737 = vmatpush2.msra.mxu0 %v1693
    %1738 = vmatprep.subr.mxu0 0.0
    %1739 = vmatpush2.msra.mxu0 %v1692
    %1740 = vmatprep.subr.mxu0 0.0
    %1741 = vmatpush2.msra.mxu0 %v1691
    %1742 = vmatprep.subr.mxu0 0.0
    %1743 = vmatpush2.msra.mxu0 %v1690
    %1744 = vmatprep.subr.mxu0 0.0
    %1745 = vmatpush2.msra.mxu0 %v1689
    %1746 = vmatprep.subr.mxu0 0.0
    %1747 = vmatpush2.msra.mxu0 %v1688
    %1748 = vmatprep.subr.mxu0 0.0
    %1749 = vmatpush2.msra.mxu0 %v1687
    %1750 = vmatprep.subr.mxu0 0.0
    %1751 = vmatpush2.msra.mxu0 %v1686
    %1752 = vmatprep.subr.mxu0 0.0
    %1753 = vmatpush2.msra.mxu0 %v1685
    %1754 = vmatprep.subr.mxu0 0.0
    %1755 = vmatpush2.msra.mxu0 %v1684
    %1756 = vmatprep.subr.mxu0 0.0
    %1757 = vmatpush2.msra.mxu0 %v1683
    %1758 = vmatprep.subr.mxu0 0.0
    %1759 = vmatpush2.msra.mxu0 %v1682
    %1760 = vmatprep.subr.mxu0 0.0
    %1761 = vmatpush2.msra.mxu0 %v1681
    %1762 = vmatprep.subr.mxu0 0.0
    %1763 = vmatpush2.msra.mxu0 %v1680
    %1764 = vmatprep.mubr.f32.mxu0 %v1660
    %1765 = vmatmul.mubr.f32.gmra.mxu0 %v1659
    %v1766 = vpop.f32.mrf.mxu0
    %v1767 = vadd.f32 %v1699, %v1766
    %v1768 = vpop.f32.mrf.mxu0
    %1769 = vmatprep.mubr.f32.mxu0 %v1662
    %1770 = vmatmul.mubr.f32.gmra.mxu0 %v1661
    %v1771 = vpop.f32.mrf.mxu0
    %v1772 = vadd.f32 %v1699, %v1771
    %v1773 = vpop.f32.mrf.mxu0
    %1774 = vdwg.mxu0
    %v1775 = vadd.f32 %v1502, %v1767
    %v1776 = vadd.f32 %v1503, %v1772
    %1777 = vadd.xlane.f32.xlu0 %v1775
    %v1778 = vpop.xlane.xlu0 %1777
    %1779 = vadd.xlane.f32.xlu0 %v1776
    %v1780 = vpop.xlane.xlu0 %1779
    %v1781 = vmul.f32 %v1778, %v100
    %v1782 = vmul.f32 %v1780, %v100
    %v1783 = vsub.f32 %v1775, %v1781
    %v1784 = vsub.f32 %v1776, %v1782
    %v1785 = vmul.f32 %v1783, %v1783
    %v1786 = vmul.f32 %v1784, %v1784
    %1787 = vadd.xlane.f32.xlu0 %v1785
    %v1788 = vpop.xlane.xlu0 %1787
    %1789 = vadd.xlane.f32.xlu0 %v1786
    %v1790 = vpop.xlane.xlu0 %1789
    %v1791 = vmul.f32 %v1788, %v100
    %v1792 = vmul.f32 %v1790, %v100
    %v1793 = vadd.f32 %v1791, 1e-05
    %v1794 = vadd.f32 %v1792, 1e-05
    %v1795 = vrsqrt.pop %v1793
    %v1796 = vrsqrt.pop %v1794
    %v1797 = vmul.f32 %v1783, %v1795
    %v1798 = vmul.f32 %v1784, %v1796
    %v1799 = vlaneseq
    %v1800 = vshrl.u32 %v1799, 7
    %v1801 = vsub.s32 4, %v1800
    %v1802 = vrot.slane %v1371, %v1801
    %v1803 = vmul.f32 %v1797, %v1802
    %v1804 = vmul.f32 %v1798, %v1802
    %v1805 = vlaneseq
    %v1806 = vshrl.u32 %v1805, 7
    %v1807 = vsub.s32 5, %v1806
    %v1808 = vrot.slane %v1371, %v1807
    %v1809 = vadd.f32 %v1803, %v1808
    %v1810 = vadd.f32 %v1804, %v1808
    %v1811 = vld [vmem:[%s11] sm:$0xff]
    %v1812 = vld [vmem:[%s11 + $0x8] sm:$0xff]
    %v1813 = vld [vmem:[%s11 + $0x10] sm:$0xff]
    %v1814 = vld [vmem:[%s11 + $0x18] sm:$0xff]
    %v1815 = vld [vmem:[%s11 + $0x20] sm:$0xff]
    %v1816 = vld [vmem:[%s11 + $0x28] sm:$0xff]
    %v1817 = vld [vmem:[%s11 + $0x30] sm:$0xff]
    %v1818 = vld [vmem:[%s11 + $0x38] sm:$0xff]
    %v1819 = vld [vmem:[%s11 + $0x40] sm:$0xff]
    %v1820 = vld [vmem:[%s11 + $0x48] sm:$0xff]
    %v1821 = vld [vmem:[%s11 + $0x50] sm:$0xff]
    %v1822 = vld [vmem:[%s11 + $0x58] sm:$0xff]
    %v1823 = vld [vmem:[%s11 + $0x60] sm:$0xff]
    %v1824 = vld [vmem:[%s11 + $0x68] sm:$0xff]
    %v1825 = vld [vmem:[%s11 + $0x70] sm:$0xff]
    %v1826 = vld [vmem:[%s11 + $0x78] sm:$0xff]
    %v1827 = vld [vmem:[%s12 + $0x2] sm:$0x1]
    %v1828 = vlaneseq
    %v1829 = vshrl.u32 %v1828, 7
    %v1830 = vsub.s32 0, %v1829
    %v1831 = vrot.slane %v1827, %v1830
    %1832 = vmatprep.subr.mxu0 0.0
    %1833 = vmatpush1.msra.mxu0 %v1826
    %1834 = vmatprep.subr.mxu0 0.0
    %1835 = vmatpush1.msra.mxu0 %v1825
    %1836 = vmatprep.subr.mxu0 0.0
    %1837 = vmatpush1.msra.mxu0 %v1824
    %1838 = vmatprep.subr.mxu0 0.0
    %1839 = vmatpush1.msra.mxu0 %v1823
    %1840 = vmatprep.subr.mxu0 0.0
    %1841 = vmatpush1.msra.mxu0 %v1822
    %1842 = vmatprep.subr.mxu0 0.0
    %1843 = vmatpush1.msra.mxu0 %v1821
    %1844 = vmatprep.subr.mxu0 0.0
    %1845 = vmatpush1.msra.mxu0 %v1820
    %1846 = vmatprep.subr.mxu0 0.0
    %1847 = vmatpush1.msra.mxu0 %v1819
    %1848 = vmatprep.subr.mxu0 0.0
    %1849 = vmatpush1.msra.mxu0 %v1818
    %1850 = vmatprep.subr.mxu0 0.0
    %1851 = vmatpush1.msra.mxu0 %v1817
    %1852 = vmatprep.subr.mxu0 0.0
    %1853 = vmatpush1.msra.mxu0 %v1816
    %1854 = vmatprep.subr.mxu0 0.0
    %1855 = vmatpush1.msra.mxu0 %v1815
    %1856 = vmatprep.subr.mxu0 0.0
    %1857 = vmatpush1.msra.mxu0 %v1814
    %1858 = vmatprep.subr.mxu0 0.0
    %1859 = vmatpush1.msra.mxu0 %v1813
    %1860 = vmatprep.subr.mxu0 0.0
    %1861 = vmatpush1.msra.mxu0 %v1812
    %1862 = vmatprep.subr.mxu0 0.0
    %1863 = vmatpush1.msra.mxu0 %v1811
    %1864 = vmatprep.subr.mxu0 0.0
    %1865 = vmatpush2.msra.mxu0 0.0
    %1866 = vmatprep.subr.mxu0 0.0
    %1867 = vmatpush2.msra.mxu0 0.0
    %1868 = vmatprep.subr.mxu0 0.0
    %1869 = vmatpush2.msra.mxu0 0.0
    %1870 = vmatprep.subr.mxu0 0.0
    %1871 = vmatpush2.msra.mxu0 0.0
    %1872 = vmatprep.subr.mxu0 0.0
    %1873 = vmatpush2.msra.mxu0 0.0
    %1874 = vmatprep.subr.mxu0 0.0
    %1875 = vmatpush2.msra.mxu0 0.0
    %1876 = vmatprep.subr.mxu0 0.0
    %1877 = vmatpush2.msra.mxu0 0.0
    %1878 = vmatprep.subr.mxu0 0.0
    %1879 = vmatpush2.msra.mxu0 0.0
    %1880 = vmatprep.subr.mxu0 0.0
    %1881 = vmatpush2.msra.mxu0 0.0
    %1882 = vmatprep.subr.mxu0 0.0
    %1883 = vmatpush2.msra.mxu0 0.0
    %1884 = vmatprep.subr.mxu0 0.0
    %1885 = vmatpush2.msra.mxu0 0.0
    %1886 = vmatprep.subr.mxu0 0.0
    %1887 = vmatpush2.msra.mxu0 0.0
    %1888 = vmatprep.subr.mxu0 0.0
    %1889 = vmatpush2.msra.mxu0 0.0
    %1890 = vmatprep.subr.mxu0 0.0
    %1891 = vmatpush2.msra.mxu0 0.0
    %1892 = vmatprep.subr.mxu0 0.0
    %1893 = vmatpush2.msra.mxu0 0.0
    %1894 = vmatprep.subr.mxu0 0.0
    %1895 = vmatpush2.msra.mxu0 0.0
    %1896 = vmatprep.mubr.f32.mxu0 0.0
    %1897 = vmatmul.mubr.f32.gmra.mxu0 %v1809
    %v1898 = vpop.f32.mrf.mxu0
    %v1899 = vadd.f32 %v1831, %v1898
    %v1900 = vpop.f32.mrf.mxu0
    %1901 = vmatprep.mubr.f32.mxu0 0.0
    %1902 = vmatmul.mubr.f32.gmra.mxu0 %v1810
    %v1903 = vpop.f32.mrf.mxu0
    %v1904 = vadd.f32 %v1831, %v1903
    %v1905 = vpop.f32.mrf.mxu0
    %1906 = vdwg.mxu0
    %v1907 = vld [vmem:[%s2] sm:$0xff]
    %v1908 = vld [vmem:[%s2 + $0x8] sm:$0xff]
    %1910 = vset.pattern.permute.xlu0 0
    %1911 = vperm.xlu0 %1910, %v1907
    %v1912 = vpop.permute.xlu0 %1911
    %1915 = vset.pattern.permute.xlu0 0
    %1916 = vperm.xlu0 %1915, %v1908
    %v1917 = vpop.permute.xlu0 %1916
    %v1919 = vmul.f32 %v1899, %v1912
    %v1920 = vmul.f32 %v1904, %v1917
    %v1921 = vmul.f32 %v1919, %v1919
    %v1922 = vmul.f32 %v1920, %v1920
    %1923 = vadd.xlane.f32.xlu0 %v1921
    %v1924 = vpop.xlane.xlu0 %1923
    %1925 = vadd.xlane.f32.xlu0 %v1922
    %v1926 = vpop.xlane.xlu0 %1925
    %v1927 = vmax.f32 %v1924, 1e-24
    %v1928 = vmax.f32 %v1926, 1e-24
    %v1929 = vrsqrt.pop %v1927
    %v1930 = vrsqrt.pop %v1928
    %v1931 = vmul.f32 %v1919, %v1929
    %v1932 = vmul.f32 %v1920, %v1930
    %1933 = vst [vmem:[%s14] sm:$0xff] %v1931
    %1934 = vst [vmem:[%s14 + $0x8] sm:$0xff] %v1932
    %v1935 = vld [vmem:[%s12 + $0x3] sm:$0x1]
    %v1936 = vlaneseq
    %v1937 = vshrl.u32 %v1936, 7
    %v1938 = vsub.s32 0, %v1937
    %v1939 = vrot.slane %v1935, %v1938
    %v1940 = vmul.f32 %v1809, %v1939
    %v1941 = vmul.f32 %v1810, %v1939
    %1942 = vadd.xlane.f32.xlu0 %v1940
    %v1943 = vpop.xlane.xlu0 %1942
    %1944 = vadd.xlane.f32.xlu0 %v1941
    %v1945 = vpop.xlane.xlu0 %1944
    %v1946 = vld [vmem:[#allocation2] sm:$0x1]
    %v1948 = vlaneseq
    %v1949 = vshrl.u32 %v1948, 7
    %v1950 = vsub.s32 0, %v1949
    %v1951 = vrot.slane %v1946, %v1950
    %v1953 = vadd.f32 %v1943, %v1951
    %v1954 = vadd.f32 %v1945, %v1951
    %v1955 = vmax.f32 %v1953, 0.0
    %v1956 = vmax.f32 %v1954, 0.0
    %v1957 = vld [vmem:[%s3] sm:$0xff]
    %v1958 = vld [vmem:[%s3 + $0x8] sm:$0xff]
    %1960 = vset.pattern.permute.xlu0 0
    %1961 = vperm.xlu0 %1960, %v1955
    %v1962 = vpop.permute.xlu0 %1961
    %1965 = vset.pattern.permute.xlu0 0
    %1966 = vperm.xlu0 %1965, %v1956
    %v1967 = vpop.permute.xlu0 %1966
    %v1969 = vmul.f32 %v1957, %v1962
    %v1970 = vmul.f32 %v1958, %v1967
    %v1971 = vmul.f32 %v1809, %v1809
    %vm1972 = vcmask 1040384
    %v1973 = vsel %vm1972, %v1971, 0.0
    %1974 = vadd.xlane.f32.xlu0 %v1973
    %v1975 = vpop.xlane.xlu0 %1974
    %v1976 = vmax.f32 %v1975, 1e-24
    %v1977 = vrsqrt.pop %v1976
    %v1978 = vmul.f32 %v1809, %v1977
    %v1979 = vrot.slane %v1969, 4
    %v1980 = vmax.f32 %v1969, %v1979
    %v1981 = vrot.slane %v1980, 2
    %v1982 = vmax.f32 %v1980, %v1981
    %v1983 = vrot.slane %v1982, 1
    %v1984 = vmax.f32 %v1982, %v1983
    %v1985 = vmul.f32 %v1810, %v1810
    %v1986 = vsel %vm1972, %v1985, 0.0
    %1987 = vadd.xlane.f32.xlu0 %v1986
    %v1988 = vpop.xlane.xlu0 %1987
    %v1989 = vmax.f32 %v1988, 1e-24
    %v1990 = vrsqrt.pop %v1989
    %v1991 = vmul.f32 %v1810, %v1990
    %v1992 = vrot.slane %v1970, 4
    %v1993 = vmax.f32 %v1970, %v1992
    %v1994 = vrot.slane %v1993, 2
    %v1995 = vmax.f32 %v1993, %v1994
    %v1996 = vrot.slane %v1995, 1
    %v1997 = vmax.f32 %v1995, %v1996
    %v2000 = vrot.slane %v1991, 7
    %v2001 = vrot.slane %v1997, 7
    %v2004 = vsel %vm1972, %v1978, %v2000
    %v2005 = vsel %vm1972, %v1984, %v2001
    %v2008 = vcombine.low %v2004, %v2005
    %v2010 = vunpack.c.l.s4 1983009808
    %v2011 = vunpack.c.0.s8 %v2010
    %v2012 = vlaneseq
    %v2013 = vshrl.u32 %v2012, 7
    %v2014 = vsub.s32 %v2011, %v2013
    %v2015 = vrot.slane %v2008, %v2014
    %2017 = vst [vmem:[%s15] sm:$0xf] %v2015
    // Predicated region
    $region70: #{_lambda_.1} parent=1 // pred_check
      _
    $region71: #{_lambda_.1} parent=1 // pred_check_branch
      %2019 = sbr.rel (0) target = $region73
    $region72: #{_lambda_.1} parent=1 // pred_region
      _
    $region73: #{_lambda_.1} parent=1 // pred_fallthru
      _
    // Predicated region
    $region74: #{_lambda_.1} parent=1 // pred_check
      _
    $region75: #{_lambda_.1} parent=1 // pred_check_branch
      %2021 = sbr.rel (0) target = $region77
    $region76: #{_lambda_.1} parent=1 // pred_region
      _
    $region77: #{_lambda_.1} parent=1 // pred_fallthru
      _
    // Predicated region
    $region78: #{_lambda_.1} parent=1 // pred_check
      _
    $region79: #{_lambda_.1} parent=1 // pred_check_branch
      %2023 = sbr.rel (0) target = $region81
    $region80: #{_lambda_.1} parent=1 // pred_region
      _
    $region81: #{_lambda_.1} parent=1 // pred_fallthru
      _
    // Predicated region
    $region82: #{_lambda_.1} parent=1 // pred_check
      _
    $region83: #{_lambda_.1} parent=1 // pred_check_branch
      %2025 = sbr.rel (0) target = $region85
    $region84: #{_lambda_.1} parent=1 // pred_region
      _
    $region85: #{_lambda_.1} parent=1 // pred_fallthru
      _
    %2026 = vsyncpa [#allocation4], 1
    %2027 = vsyncpa [#allocation6], 1

</llo_original>
